<compile_context>
chip_gen: v7x
topology: tpu7x:2x2x1
jax: 0.10.0
libtpu: 0.0.40
codegen_flags: <defaults>
</compile_context>

<pallas_src>
import functools
import math

import numpy as np
import jax
import jax.numpy as jnp
from jax.experimental import pallas as pl
from jax.experimental.pallas import tpu as pltpu


# ---------------------------------------------------------------------------
# "option" hyper-parameters (option.model.*), small & deterministic
# ---------------------------------------------------------------------------
LEVEL = 4            # option.model.level
FEATURE_FETCH = 2    # option.model.feature_fetch  (candidates per disparity)
INPLANES = 4         # option.model.inplanes  (= C of the input features)
MINDISP = -4.0
MAXDISP = 4.0


def make_costrange(level, mindisp, maxdisp):
    # mirrors CostVolume.__init__ exactly
    return (np.arange(level, dtype=np.float64)
            * ((maxdisp / 4.0 - mindisp / 4.0) / float(level))
            + mindisp / 4.0)


def _integer_shifts(costrange, feature_fetch):
    """Static integer candidate shifts per level: d = floor(disp) + k."""
    return tuple(tuple(int(math.floor(float(d))) + k for k in range(feature_fetch))
                 for d in costrange)


# ---------------------------------------------------------------------------
# Integer vertical (H / y-axis) shift with zero padding (CostVolume docstring)
#   disp > 0: forward out[:-d]=src[:-d]   backward out[:-d]=src[d:]
#   disp < 0: forward out[-d:]=src[-d:]   backward out[-d:]=src[:d]
# Used (a) to pre-shift the target features per *unique* integer shift for the
# kernel and (b) inside the pure-JAX validation reference.
# ---------------------------------------------------------------------------
def _shift_rows(feat, d, direction):
    _, _, H, _ = feat.shape
    d = int(d)
    if d == 0:
        return feat
    out = jnp.zeros_like(feat)
    if d > 0:
        if direction == "forward":
            out = out.at[:, :, : H - d, :].set(feat[:, :, : H - d, :])
        else:
            out = out.at[:, :, : H - d, :].set(feat[:, :, d:, :])
    else:
        dd = -d
        if direction == "forward":
            out = out.at[:, :, dd:, :].set(feat[:, :, dd:, :])
        else:
            out = out.at[:, :, dd:, :].set(feat[:, :, : H - dd, :])
    return out


# ---------------------------------------------------------------------------
# Pallas kernel: all levels / directions / candidates for one (batch, tile)
# ---------------------------------------------------------------------------
def _cost_volume_kernel(w_ref, b_ref, ref_ref, tars_ref, o_ref, *,
                        levels_dk, shift_index, C, K, W, HW, T):
    """w_ref   : SMEM (K*C,) f32   masking-attention 1x1 conv weights
       b_ref   : SMEM (K,)   f32   per-candidate bias
       ref_ref : VMEM (1, C, T)    reference features (flattened H*W lanes)
       tars_ref: VMEM (1, S, C, T) target features, pre-shifted per unique d
       o_ref   : VMEM (1, L, 2C, T) volume slab ([:C]=forward, [C:]=backward)
    """
    t = pl.program_id(1)
    lane = jax.lax.broadcasted_iota(jnp.int32, (1, T), 1)
    hw = lane + t * T                                    # global flattened index

    ref = ref_ref[0].astype(jnp.float32)                 # [C, T]

    # hoisted 1x1 channel projection (VPU; C=4 is far too small for the MXU)
    def channel_proj(x, k):                              # sum_c w[k,c] * x[c]
        acc = w_ref[k * C] * x[0:1, :]
        for c in range(1, C):
            acc = acc + w_ref[k * C + c] * x[c:c + 1, :]
        return acc                                       # [1, T]

    proj_fwd = [channel_proj(ref, k) for k in range(K)]

    # per-unique-shift boundary masks (0 <= h+d < H  <=>  0 <= hw+d*W < H*W)
    uniq_d = sorted({d for dk in levels_dk for d in dk})
    masks, tar_d = {}, {}
    for d in uniq_d:
        valid = ((hw + d * W) >= 0) & ((hw + d * W) < HW)
        masks[d] = valid.astype(jnp.float32)                          # [1, T]
        tar_d[d] = tars_ref[0, shift_index[d]].astype(jnp.float32)    # [C, T]

    proj_bwd = {}
    for dk in levels_dk:
        for k in range(K):
            key = (k, dk[k])
            if key not in proj_bwd:
                proj_bwd[key] = channel_proj(tar_d[dk[k]], k)

    def softmax_k(logits):                               # list of [1, T]
        m = logits[0]
        for lg in logits[1:]:
            m = jnp.maximum(m, lg)
        es = [jnp.exp(lg - m) for lg in logits]
        denom = es[0]
        for e in es[1:]:
            denom = denom + e
        inv = pl.reciprocal(denom, approx=True)          # EUP slot (nearly free)
        return [e * inv for e in es]

    for l, dk in enumerate(levels_dk):
        # forward direction: candidate_k = mask[d_k] * ref   (no actual shift)
        attn_f = softmax_k([masks[dk[k]] * proj_fwd[k] + b_ref[k]
                            for k in range(K)])
        gate_f = attn_f[0] * masks[dk[0]]
        for k in range(1, K):
            gate_f = gate_f + attn_f[k] * masks[dk[k]]
        out_f = ref * gate_f                                         # [C, T]

        # backward direction: candidate_k = zero-padded shift of tar by d_k
        attn_b = softmax_k([proj_bwd[(k, dk[k])] + b_ref[k] for k in range(K)])
        out_b = attn_b[0] * tar_d[dk[0]]
        for k in range(1, K):
            out_b = out_b + attn_b[k] * tar_d[dk[k]]                 # [C, T]

        # the per-level output block stays a dense [2C, T] = [8, 256] tile
        o_ref[0, l, 0:C, :] = out_f.astype(o_ref.dtype)
        o_ref[0, l, C:2 * C, :] = out_b.astype(o_ref.dtype)


# ---------------------------------------------------------------------------
# CostVolume.forward (Pallas path)
# ---------------------------------------------------------------------------
def cost_volume_pallas(ref_feat, tar_feat, w, b, costrange, feature_fetch,
                       lane_tile=None):
    B, C, H, W = ref_feat.shape
    K = int(feature_fetch)
    L = len(costrange)
    HW = H * W

    levels_dk = _integer_shifts(costrange, K)
    uniq_d = sorted({d for dk in levels_dk for d in dk})
    shift_index = {d: i for i, d in enumerate(uniq_d)}
    S = len(uniq_d)

    # Pre-shift the target features once per *unique* integer shift (zero pad).
    # This is small glue data-movement (S = 3 copies here), NOT the 2*L*K = 16x
    # candidate duplication of the previous version.
    # TODO(synk): could be folded into the kernel with pltpu.roll on the lane
    # axis to remove this last bit of duplication entirely.
    tars = jnp.stack([_shift_rows(tar_feat, d, "backward") for d in uniq_d],
                     axis=1)                                   # [B, S, C, H, W]

    ref2 = ref_feat.reshape(B, C, HW)
    tars2 = tars.reshape(B, S, C, HW)
    w_flat = w.reshape(K * C).astype(jnp.float32)
    b_flat = b.reshape(K).astype(jnp.float32)

    # lane tile: multiple of 128 dividing HW; whole HW for small feature maps.
    # (For big maps sweep 512..2048; re-derive against 64 MiB VMEM on v7x.)
    if lane_tile is None:
        lane_tile = HW if HW <= 2048 else 2048
    assert HW % lane_tile == 0 and lane_tile % 128 == 0
    n_t = HW // lane_tile

    kernel = functools.partial(_cost_volume_kernel, levels_dk=levels_dk,
                               shift_index=shift_index, C=C, K=K, W=W,
                               HW=HW, T=lane_tile)

    out = pl.pallas_call(
        kernel,
        out_shape=jax.ShapeDtypeStruct((B, L, 2 * C, HW), ref_feat.dtype),
        grid=(B, n_t),
        in_specs=[
            pl.BlockSpec(memory_space=pltpu.MemorySpace.SMEM),   # weights
            pl.BlockSpec(memory_space=pltpu.MemorySpace.SMEM),   # biases
            pl.BlockSpec((1, C, lane_tile), lambda bb, tt: (bb, 0, tt)),
            pl.BlockSpec((1, S, C, lane_tile), lambda bb, tt: (bb, 0, 0, tt)),
        ],
        out_specs=pl.BlockSpec((1, L, 2 * C, lane_tile),
                               lambda bb, tt: (bb, 0, 0, tt)),
        compiler_params=pltpu.CompilerParams(
            dimension_semantics=("parallel", "parallel")),
    )(w_flat, b_flat, ref2, tars2)

    # layout plumbing back to the PyTorch volume layout [B, 2C, L, H, W]
    y = out.reshape(B, L, 2 * C, H, W)
    return jnp.transpose(y, (0, 2, 1, 3, 4))


# ---------------------------------------------------------------------------
# Pure-JAX reference (validation only): materialized candidates + softmax attn
# TODO(synk): the original subpixel_shift / MaskingAttention sources were not
# provided; this candidate-fetch (floor(disp)+k) + softmax-masking formulation
# follows the documented slicing scheme and module signatures.
# ---------------------------------------------------------------------------
def subpixel_shift(feat, disp, direction, feature_fetch):
    base = int(math.floor(float(disp)))
    cands = [_shift_rows(feat, base + k, direction) for k in range(feature_fetch)]
    return jnp.stack(cands, axis=0)                      # [K, B, C, H, W]


def _build_candidates(ref_feat, tar_feat, costrange, feature_fetch):
    per_level = []
    for disp in costrange:
        fwd = subpixel_shift(ref_feat, disp, "forward", feature_fetch)
        bwd = subpixel_shift(tar_feat, disp, "backward", feature_fetch)
        per_level.append(jnp.stack([fwd, bwd], axis=0))  # [2, K, B, C, H, W]
    x = jnp.stack(per_level, axis=0)                     # [L, 2, K, B, C, H, W]
    return jnp.transpose(x, (3, 1, 0, 2, 4, 5, 6))       # [B, 2, L, K, C, H, W]


def _masking_attention_ref(x, w, b):
    logits = jnp.einsum("kc,nkcp->nkp", w, x) + b[None, :, :]
    attn = jax.nn.softmax(logits, axis=1)
    return jnp.einsum("nkp,nkcp->ncp", attn, x)


def cost_volume_reference(ref_feat, tar_feat, w, b, costrange, feature_fetch):
    B, C, H, W = ref_feat.shape
    L = len(costrange)
    x = _build_candidates(ref_feat, tar_feat, costrange, feature_fetch)
    xf = x.reshape(B * 2 * L, feature_fetch, C, H * W)
    y = _masking_attention_ref(xf, w, b)
    y = y.reshape(B, 2, L, C, H, W)
    y = jnp.transpose(y, (0, 1, 3, 2, 4, 5))
    return y.reshape(B, 2 * C, L, H, W)


if __name__ == "__main__":
    B, C, H, W = 2, INPLANES, 16, 16

    key = jax.random.PRNGKey(0)
    k1, k2, k3, k4 = jax.random.split(key, 4)
    ref_feat = jax.random.normal(k1, (B, C, H, W), jnp.float32)
    tar_feat = jax.random.normal(k2, (B, C, H, W), jnp.float32)

    # deterministic MaskingAttention parameters (1x1 conv per fetched candidate)
    w = 0.1 * jax.random.normal(k3, (FEATURE_FETCH, C), jnp.float32)
    b = 0.1 * jax.random.normal(k4, (FEATURE_FETCH, 1), jnp.float32)

    costrange = make_costrange(LEVEL, MINDISP, MAXDISP)   # [-1.0, -0.5, 0.0, 0.5]

    @jax.jit
    def run(rf, tf, ww, bb):
        return cost_volume_pallas(rf, tf, ww, bb, costrange, FEATURE_FETCH)

    vol = jax.block_until_ready(run(ref_feat, tar_feat, w, b))
    assert vol.shape == (B, 2 * C, LEVEL, H, W), vol.shape

    # validate the fused Pallas pipeline against the pure-JAX reference.
    # tolerance is loosened slightly because the kernel uses the EUP's
    # approximate reciprocal for the softmax denominator.
    vol_ref = jax.block_until_ready(
        cost_volume_reference(ref_feat, tar_feat, w, b, costrange, FEATURE_FETCH))
    np.testing.assert_allclose(np.asarray(vol), np.asarray(vol_ref),
                               rtol=5e-3, atol=5e-3)

    print("KERNEL_OK")
</pallas_src>

<mosaic_0001>
module attributes {stable_mosaic.version = 11 : i64} {
  func.func @_cost_volume_kernel(%arg0: i32, %arg1: i32, %arg2: memref<8xf32, #tpu.memory_space<smem>>, %arg3: memref<2xf32, #tpu.memory_space<smem>>, %arg4: memref<1x4x256xf32, #tpu.memory_space<vmem>>, %arg5: memref<1x3x4x256xf32, #tpu.memory_space<vmem>>, %arg6: memref<1x4x8x256xf32, #tpu.memory_space<vmem>>) attributes {dimension_semantics = [#tpu.dimension_semantics<parallel>, #tpu.dimension_semantics<parallel>], iteration_bounds = array<i64: 2, 1>, scalar_prefetch = 0 : i64, scratch_operands = 0 : i64, tpu.core_type = #tpu.core_type<tc>, window_params = [{transform_indices = @transform_0, window_bounds = array<i64: 8>}, {transform_indices = @transform_1, window_bounds = array<i64: 2>}, {transform_indices = @transform_2, window_bounds = array<i64: 1, 4, 256>}, {transform_indices = @transform_3, window_bounds = array<i64: 1, 3, 4, 256>}, {transform_indices = @transform_4, window_bounds = array<i64: 1, 4, 8, 256>}]} {
    %0 = tpu.iota {dimensions = array<i32: 1>} : vector<1x256xi32>
    %c256_i32 = arith.constant 256 : i32
    %1 = arith.muli %arg1, %c256_i32 : i32
    %2 = vector.broadcast %1 : i32 to vector<1x256xi32>
    %3 = arith.addi %0, %2 : vector<1x256xi32>
    %c0 = arith.constant 0 : index
    %c0_0 = arith.constant 0 : index
    %c0_1 = arith.constant 0 : index
    %4 = vector.load %arg4[%c0, %c0_0, %c0_1] : memref<1x4x256xf32, #tpu.memory_space<vmem>>, vector<1x4x256xf32>
    %5 = vector.shape_cast %4 : vector<1x4x256xf32> to vector<4x256xf32>
    %c0_2 = arith.constant 0 : index
    %6 = memref.load %arg2[%c0_2] : memref<8xf32, #tpu.memory_space<smem>>
    %7 = vector.extract_strided_slice %5 {offsets = [0, 0], sizes = [1, 256], strides = [1, 1]} : vector<4x256xf32> to vector<1x256xf32>
    %8 = vector.broadcast %6 : f32 to vector<1x256xf32>
    %9 = arith.mulf %8, %7 : vector<1x256xf32>
    %c1 = arith.constant 1 : index
    %10 = memref.load %arg2[%c1] : memref<8xf32, #tpu.memory_space<smem>>
    %11 = vector.extract_strided_slice %5 {offsets = [1, 0], sizes = [1, 256], strides = [1, 1]} : vector<4x256xf32> to vector<1x256xf32>
    %12 = vector.broadcast %10 : f32 to vector<1x256xf32>
    %13 = arith.mulf %12, %11 : vector<1x256xf32>
    %14 = arith.addf %9, %13 : vector<1x256xf32>
    %c2 = arith.constant 2 : index
    %15 = memref.load %arg2[%c2] : memref<8xf32, #tpu.memory_space<smem>>
    %16 = vector.extract_strided_slice %5 {offsets = [2, 0], sizes = [1, 256], strides = [1, 1]} : vector<4x256xf32> to vector<1x256xf32>
    %17 = vector.broadcast %15 : f32 to vector<1x256xf32>
    %18 = arith.mulf %17, %16 : vector<1x256xf32>
    %19 = arith.addf %14, %18 : vector<1x256xf32>
    %c3 = arith.constant 3 : index
    %20 = memref.load %arg2[%c3] : memref<8xf32, #tpu.memory_space<smem>>
    %21 = vector.extract_strided_slice %5 {offsets = [3, 0], sizes = [1, 256], strides = [1, 1]} : vector<4x256xf32> to vector<1x256xf32>
    %22 = vector.broadcast %20 : f32 to vector<1x256xf32>
    %23 = arith.mulf %22, %21 : vector<1x256xf32>
    %24 = arith.addf %19, %23 : vector<1x256xf32>
    %c4 = arith.constant 4 : index
    %25 = memref.load %arg2[%c4] : memref<8xf32, #tpu.memory_space<smem>>
    %26 = vector.extract_strided_slice %5 {offsets = [0, 0], sizes = [1, 256], strides = [1, 1]} : vector<4x256xf32> to vector<1x256xf32>
    %27 = vector.broadcast %25 : f32 to vector<1x256xf32>
    %28 = arith.mulf %27, %26 : vector<1x256xf32>
    %c5 = arith.constant 5 : index
    %29 = memref.load %arg2[%c5] : memref<8xf32, #tpu.memory_space<smem>>
    %30 = vector.extract_strided_slice %5 {offsets = [1, 0], sizes = [1, 256], strides = [1, 1]} : vector<4x256xf32> to vector<1x256xf32>
    %31 = vector.broadcast %29 : f32 to vector<1x256xf32>
    %32 = arith.mulf %31, %30 : vector<1x256xf32>
    %33 = arith.addf %28, %32 : vector<1x256xf32>
    %c6 = arith.constant 6 : index
    %34 = memref.load %arg2[%c6] : memref<8xf32, #tpu.memory_space<smem>>
    %35 = vector.extract_strided_slice %5 {offsets = [2, 0], sizes = [1, 256], strides = [1, 1]} : vector<4x256xf32> to vector<1x256xf32>
    %36 = vector.broadcast %34 : f32 to vector<1x256xf32>
    %37 = arith.mulf %36, %35 : vector<1x256xf32>
    %38 = arith.addf %33, %37 : vector<1x256xf32>
    %c7 = arith.constant 7 : index
    %39 = memref.load %arg2[%c7] : memref<8xf32, #tpu.memory_space<smem>>
    %40 = vector.extract_strided_slice %5 {offsets = [3, 0], sizes = [1, 256], strides = [1, 1]} : vector<4x256xf32> to vector<1x256xf32>
    %41 = vector.broadcast %39 : f32 to vector<1x256xf32>
    %42 = arith.mulf %41, %40 : vector<1x256xf32>
    %43 = arith.addf %38, %42 : vector<1x256xf32>
    %c-16_i32 = arith.constant -16 : i32
    %44 = vector.broadcast %c-16_i32 : i32 to vector<1x256xi32>
    %45 = arith.addi %3, %44 : vector<1x256xi32>
    %c0_i32 = arith.constant 0 : i32
    %46 = vector.broadcast %c0_i32 : i32 to vector<1x256xi32>
    %47 = arith.cmpi sge, %45, %46 : vector<1x256xi32>
    %c-16_i32_3 = arith.constant -16 : i32
    %48 = vector.broadcast %c-16_i32_3 : i32 to vector<1x256xi32>
    %49 = arith.addi %3, %48 : vector<1x256xi32>
    %c256_i32_4 = arith.constant 256 : i32
    %50 = vector.broadcast %c256_i32_4 : i32 to vector<1x256xi32>
    %51 = arith.cmpi slt, %49, %50 : vector<1x256xi32>
    %52 = arith.andi %47, %51 : vector<1x256xi1>
    %53 = arith.extui %52 : vector<1x256xi1> to vector<1x256xi32>
    %54 = arith.sitofp %53 : vector<1x256xi32> to vector<1x256xf32>
    %c0_5 = arith.constant 0 : index
    %c0_6 = arith.constant 0 : index
    %c0_7 = arith.constant 0 : index
    %c0_8 = arith.constant 0 : index
    %55 = vector.load %arg5[%c0_5, %c0_6, %c0_7, %c0_8] : memref<1x3x4x256xf32, #tpu.memory_space<vmem>>, vector<1x1x4x256xf32>
    %56 = vector.shape_cast %55 : vector<1x1x4x256xf32> to vector<4x256xf32>
    %c0_i32_9 = arith.constant 0 : i32
    %57 = vector.broadcast %c0_i32_9 : i32 to vector<1x256xi32>
    %58 = arith.addi %3, %57 : vector<1x256xi32>
    %c0_i32_10 = arith.constant 0 : i32
    %59 = vector.broadcast %c0_i32_10 : i32 to vector<1x256xi32>
    %60 = arith.cmpi sge, %58, %59 : vector<1x256xi32>
    %c0_i32_11 = arith.constant 0 : i32
    %61 = vector.broadcast %c0_i32_11 : i32 to vector<1x256xi32>
    %62 = arith.addi %3, %61 : vector<1x256xi32>
    %c256_i32_12 = arith.constant 256 : i32
    %63 = vector.broadcast %c256_i32_12 : i32 to vector<1x256xi32>
    %64 = arith.cmpi slt, %62, %63 : vector<1x256xi32>
    %65 = arith.andi %60, %64 : vector<1x256xi1>
    %66 = arith.extui %65 : vector<1x256xi1> to vector<1x256xi32>
    %67 = arith.sitofp %66 : vector<1x256xi32> to vector<1x256xf32>
    %c0_13 = arith.constant 0 : index
    %c1_14 = arith.constant 1 : index
    %c0_15 = arith.constant 0 : index
    %c0_16 = arith.constant 0 : index
    %68 = vector.load %arg5[%c0_13, %c1_14, %c0_15, %c0_16] : memref<1x3x4x256xf32, #tpu.memory_space<vmem>>, vector<1x1x4x256xf32>
    %69 = vector.shape_cast %68 : vector<1x1x4x256xf32> to vector<4x256xf32>
    %c16_i32 = arith.constant 16 : i32
    %70 = vector.broadcast %c16_i32 : i32 to vector<1x256xi32>
    %71 = arith.addi %3, %70 : vector<1x256xi32>
    %c0_i32_17 = arith.constant 0 : i32
    %72 = vector.broadcast %c0_i32_17 : i32 to vector<1x256xi32>
    %73 = arith.cmpi sge, %71, %72 : vector<1x256xi32>
    %c16_i32_18 = arith.constant 16 : i32
    %74 = vector.broadcast %c16_i32_18 : i32 to vector<1x256xi32>
    %75 = arith.addi %3, %74 : vector<1x256xi32>
    %c256_i32_19 = arith.constant 256 : i32
    %76 = vector.broadcast %c256_i32_19 : i32 to vector<1x256xi32>
    %77 = arith.cmpi slt, %75, %76 : vector<1x256xi32>
    %78 = arith.andi %73, %77 : vector<1x256xi1>
    %79 = arith.extui %78 : vector<1x256xi1> to vector<1x256xi32>
    %80 = arith.sitofp %79 : vector<1x256xi32> to vector<1x256xf32>
    %c0_20 = arith.constant 0 : index
    %c2_21 = arith.constant 2 : index
    %c0_22 = arith.constant 0 : index
    %c0_23 = arith.constant 0 : index
    %81 = vector.load %arg5[%c0_20, %c2_21, %c0_22, %c0_23] : memref<1x3x4x256xf32, #tpu.memory_space<vmem>>, vector<1x1x4x256xf32>
    %82 = vector.shape_cast %81 : vector<1x1x4x256xf32> to vector<4x256xf32>
    %c0_24 = arith.constant 0 : index
    %83 = memref.load %arg2[%c0_24] : memref<8xf32, #tpu.memory_space<smem>>
    %84 = vector.extract_strided_slice %56 {offsets = [0, 0], sizes = [1, 256], strides = [1, 1]} : vector<4x256xf32> to vector<1x256xf32>
    %85 = vector.broadcast %83 : f32 to vector<1x256xf32>
    %86 = arith.mulf %85, %84 : vector<1x256xf32>
    %c1_25 = arith.constant 1 : index
    %87 = memref.load %arg2[%c1_25] : memref<8xf32, #tpu.memory_space<smem>>
    %88 = vector.extract_strided_slice %56 {offsets = [1, 0], sizes = [1, 256], strides = [1, 1]} : vector<4x256xf32> to vector<1x256xf32>
    %89 = vector.broadcast %87 : f32 to vector<1x256xf32>
    %90 = arith.mulf %89, %88 : vector<1x256xf32>
    %91 = arith.addf %86, %90 : vector<1x256xf32>
    %c2_26 = arith.constant 2 : index
    %92 = memref.load %arg2[%c2_26] : memref<8xf32, #tpu.memory_space<smem>>
    %93 = vector.extract_strided_slice %56 {offsets = [2, 0], sizes = [1, 256], strides = [1, 1]} : vector<4x256xf32> to vector<1x256xf32>
    %94 = vector.broadcast %92 : f32 to vector<1x256xf32>
    %95 = arith.mulf %94, %93 : vector<1x256xf32>
    %96 = arith.addf %91, %95 : vector<1x256xf32>
    %c3_27 = arith.constant 3 : index
    %97 = memref.load %arg2[%c3_27] : memref<8xf32, #tpu.memory_space<smem>>
    %98 = vector.extract_strided_slice %56 {offsets = [3, 0], sizes = [1, 256], strides = [1, 1]} : vector<4x256xf32> to vector<1x256xf32>
    %99 = vector.broadcast %97 : f32 to vector<1x256xf32>
    %100 = arith.mulf %99, %98 : vector<1x256xf32>
    %101 = arith.addf %96, %100 : vector<1x256xf32>
    %c4_28 = arith.constant 4 : index
    %102 = memref.load %arg2[%c4_28] : memref<8xf32, #tpu.memory_space<smem>>
    %103 = vector.extract_strided_slice %69 {offsets = [0, 0], sizes = [1, 256], strides = [1, 1]} : vector<4x256xf32> to vector<1x256xf32>
    %104 = vector.broadcast %102 : f32 to vector<1x256xf32>
    %105 = arith.mulf %104, %103 : vector<1x256xf32>
    %c5_29 = arith.constant 5 : index
    %106 = memref.load %arg2[%c5_29] : memref<8xf32, #tpu.memory_space<smem>>
    %107 = vector.extract_strided_slice %69 {offsets = [1, 0], sizes = [1, 256], strides = [1, 1]} : vector<4x256xf32> to vector<1x256xf32>
    %108 = vector.broadcast %106 : f32 to vector<1x256xf32>
    %109 = arith.mulf %108, %107 : vector<1x256xf32>
    %110 = arith.addf %105, %109 : vector<1x256xf32>
    %c6_30 = arith.constant 6 : index
    %111 = memref.load %arg2[%c6_30] : memref<8xf32, #tpu.memory_space<smem>>
    %112 = vector.extract_strided_slice %69 {offsets = [2, 0], sizes = [1, 256], strides = [1, 1]} : vector<4x256xf32> to vector<1x256xf32>
    %113 = vector.broadcast %111 : f32 to vector<1x256xf32>
    %114 = arith.mulf %113, %112 : vector<1x256xf32>
    %115 = arith.addf %110, %114 : vector<1x256xf32>
    %c7_31 = arith.constant 7 : index
    %116 = memref.load %arg2[%c7_31] : memref<8xf32, #tpu.memory_space<smem>>
    %117 = vector.extract_strided_slice %69 {offsets = [3, 0], sizes = [1, 256], strides = [1, 1]} : vector<4x256xf32> to vector<1x256xf32>
    %118 = vector.broadcast %116 : f32 to vector<1x256xf32>
    %119 = arith.mulf %118, %117 : vector<1x256xf32>
    %120 = arith.addf %115, %119 : vector<1x256xf32>
    %c0_32 = arith.constant 0 : index
    %121 = memref.load %arg2[%c0_32] : memref<8xf32, #tpu.memory_space<smem>>
    %122 = vector.extract_strided_slice %69 {offsets = [0, 0], sizes = [1, 256], strides = [1, 1]} : vector<4x256xf32> to vector<1x256xf32>
    %123 = vector.broadcast %121 : f32 to vector<1x256xf32>
    %124 = arith.mulf %123, %122 : vector<1x256xf32>
    %c1_33 = arith.constant 1 : index
    %125 = memref.load %arg2[%c1_33] : memref<8xf32, #tpu.memory_space<smem>>
    %126 = vector.extract_strided_slice %69 {offsets = [1, 0], sizes = [1, 256], strides = [1, 1]} : vector<4x256xf32> to vector<1x256xf32>
    %127 = vector.broadcast %125 : f32 to vector<1x256xf32>
    %128 = arith.mulf %127, %126 : vector<1x256xf32>
    %129 = arith.addf %124, %128 : vector<1x256xf32>
    %c2_34 = arith.constant 2 : index
    %130 = memref.load %arg2[%c2_34] : memref<8xf32, #tpu.memory_space<smem>>
    %131 = vector.extract_strided_slice %69 {offsets = [2, 0], sizes = [1, 256], strides = [1, 1]} : vector<4x256xf32> to vector<1x256xf32>
    %132 = vector.broadcast %130 : f32 to vector<1x256xf32>
    %133 = arith.mulf %132, %131 : vector<1x256xf32>
    %134 = arith.addf %129, %133 : vector<1x256xf32>
    %c3_35 = arith.constant 3 : index
    %135 = memref.load %arg2[%c3_35] : memref<8xf32, #tpu.memory_space<smem>>
    %136 = vector.extract_strided_slice %69 {offsets = [3, 0], sizes = [1, 256], strides = [1, 1]} : vector<4x256xf32> to vector<1x256xf32>
    %137 = vector.broadcast %135 : f32 to vector<1x256xf32>
    %138 = arith.mulf %137, %136 : vector<1x256xf32>
    %139 = arith.addf %134, %138 : vector<1x256xf32>
    %c4_36 = arith.constant 4 : index
    %140 = memref.load %arg2[%c4_36] : memref<8xf32, #tpu.memory_space<smem>>
    %141 = vector.extract_strided_slice %82 {offsets = [0, 0], sizes = [1, 256], strides = [1, 1]} : vector<4x256xf32> to vector<1x256xf32>
    %142 = vector.broadcast %140 : f32 to vector<1x256xf32>
    %143 = arith.mulf %142, %141 : vector<1x256xf32>
    %c5_37 = arith.constant 5 : index
    %144 = memref.load %arg2[%c5_37] : memref<8xf32, #tpu.memory_space<smem>>
    %145 = vector.extract_strided_slice %82 {offsets = [1, 0], sizes = [1, 256], strides = [1, 1]} : vector<4x256xf32> to vector<1x256xf32>
    %146 = vector.broadcast %144 : f32 to vector<1x256xf32>
    %147 = arith.mulf %146, %145 : vector<1x256xf32>
    %148 = arith.addf %143, %147 : vector<1x256xf32>
    %c6_38 = arith.constant 6 : index
    %149 = memref.load %arg2[%c6_38] : memref<8xf32, #tpu.memory_space<smem>>
    %150 = vector.extract_strided_slice %82 {offsets = [2, 0], sizes = [1, 256], strides = [1, 1]} : vector<4x256xf32> to vector<1x256xf32>
    %151 = vector.broadcast %149 : f32 to vector<1x256xf32>
    %152 = arith.mulf %151, %150 : vector<1x256xf32>
    %153 = arith.addf %148, %152 : vector<1x256xf32>
    %c7_39 = arith.constant 7 : index
    %154 = memref.load %arg2[%c7_39] : memref<8xf32, #tpu.memory_space<smem>>
    %155 = vector.extract_strided_slice %82 {offsets = [3, 0], sizes = [1, 256], strides = [1, 1]} : vector<4x256xf32> to vector<1x256xf32>
    %156 = vector.broadcast %154 : f32 to vector<1x256xf32>
    %157 = arith.mulf %156, %155 : vector<1x256xf32>
    %158 = arith.addf %153, %157 : vector<1x256xf32>
    %159 = arith.mulf %54, %24 : vector<1x256xf32>
    %c0_40 = arith.constant 0 : index
    %160 = memref.load %arg3[%c0_40] : memref<2xf32, #tpu.memory_space<smem>>
    %161 = vector.broadcast %160 : f32 to vector<1x256xf32>
    %162 = arith.addf %159, %161 : vector<1x256xf32>
    %163 = arith.mulf %67, %43 : vector<1x256xf32>
    %c1_41 = arith.constant 1 : index
    %164 = memref.load %arg3[%c1_41] : memref<2xf32, #tpu.memory_space<smem>>
    %165 = vector.broadcast %164 : f32 to vector<1x256xf32>
    %166 = arith.addf %163, %165 : vector<1x256xf32>
    %167 = arith.maximumf %162, %166 : vector<1x256xf32>
    %168 = arith.subf %162, %167 : vector<1x256xf32>
    %169 = math.exp %168 : vector<1x256xf32>
    %170 = arith.subf %166, %167 : vector<1x256xf32>
    %171 = math.exp %170 : vector<1x256xf32>
    %172 = arith.addf %169, %171 : vector<1x256xf32>
    %173 = tpu.reciprocal %172 {approx = true} : vector<1x256xf32> -> vector<1x256xf32>
    %174 = arith.mulf %169, %173 : vector<1x256xf32>
    %175 = arith.mulf %171, %173 : vector<1x256xf32>
    %176 = arith.mulf %174, %54 : vector<1x256xf32>
    %177 = arith.mulf %175, %67 : vector<1x256xf32>
    %178 = arith.addf %176, %177 : vector<1x256xf32>
    %179 = vector.broadcast %178 : vector<1x256xf32> to vector<4x256xf32>
    %180 = arith.mulf %5, %179 : vector<4x256xf32>
    %c0_42 = arith.constant 0 : index
    %181 = memref.load %arg3[%c0_42] : memref<2xf32, #tpu.memory_space<smem>>
    %182 = vector.broadcast %181 : f32 to vector<1x256xf32>
    %183 = arith.addf %101, %182 : vector<1x256xf32>
    %c1_43 = arith.constant 1 : index
    %184 = memref.load %arg3[%c1_43] : memref<2xf32, #tpu.memory_space<smem>>
    %185 = vector.broadcast %184 : f32 to vector<1x256xf32>
    %186 = arith.addf %120, %185 : vector<1x256xf32>
    %187 = arith.maximumf %183, %186 : vector<1x256xf32>
    %188 = arith.subf %183, %187 : vector<1x256xf32>
    %189 = math.exp %188 : vector<1x256xf32>
    %190 = arith.subf %186, %187 : vector<1x256xf32>
    %191 = math.exp %190 : vector<1x256xf32>
    %192 = arith.addf %189, %191 : vector<1x256xf32>
    %193 = tpu.reciprocal %192 {approx = true} : vector<1x256xf32> -> vector<1x256xf32>
    %194 = arith.mulf %189, %193 : vector<1x256xf32>
    %195 = arith.mulf %191, %193 : vector<1x256xf32>
    %196 = vector.broadcast %194 : vector<1x256xf32> to vector<4x256xf32>
    %197 = arith.mulf %196, %56 : vector<4x256xf32>
    %198 = vector.broadcast %195 : vector<1x256xf32> to vector<4x256xf32>
    %199 = arith.mulf %198, %69 : vector<4x256xf32>
    %200 = arith.addf %197, %199 : vector<4x256xf32>
    %c0_44 = arith.constant 0 : index
    %c0_45 = arith.constant 0 : index
    %c0_46 = arith.constant 0 : index
    %c0_47 = arith.constant 0 : index
    %201 = vector.load %arg6[%c0_44, %c0_45, %c0_46, %c0_47] : memref<1x4x8x256xf32, #tpu.memory_space<vmem>>, vector<1x1x4x256xf32>
    %202 = vector.shape_cast %201 : vector<1x1x4x256xf32> to vector<4x256xf32>
    %203 = vector.shape_cast %180 : vector<4x256xf32> to vector<1x1x4x256xf32>
    tpu.vector_store %arg6[%c0_44, %c0_45, %c0_46, %c0_47], %203 {strides = array<i32>} : memref<1x4x8x256xf32, #tpu.memory_space<vmem>>, vector<1x1x4x256xf32>,
    %c0_48 = arith.constant 0 : index
    %c0_49 = arith.constant 0 : index
    %c4_50 = arith.constant 4 : index
    %c0_51 = arith.constant 0 : index
    %204 = vector.load %arg6[%c0_48, %c0_49, %c4_50, %c0_51] : memref<1x4x8x256xf32, #tpu.memory_space<vmem>>, vector<1x1x4x256xf32>
    %205 = vector.shape_cast %204 : vector<1x1x4x256xf32> to vector<4x256xf32>
    %206 = vector.shape_cast %200 : vector<4x256xf32> to vector<1x1x4x256xf32>
    tpu.vector_store %arg6[%c0_48, %c0_49, %c4_50, %c0_51], %206 {strides = array<i32>} : memref<1x4x8x256xf32, #tpu.memory_space<vmem>>, vector<1x1x4x256xf32>,
    %207 = arith.mulf %54, %24 : vector<1x256xf32>
    %c0_52 = arith.constant 0 : index
    %208 = memref.load %arg3[%c0_52] : memref<2xf32, #tpu.memory_space<smem>>
    %209 = vector.broadcast %208 : f32 to vector<1x256xf32>
    %210 = arith.addf %207, %209 : vector<1x256xf32>
    %211 = arith.mulf %67, %43 : vector<1x256xf32>
    %c1_53 = arith.constant 1 : index
    %212 = memref.load %arg3[%c1_53] : memref<2xf32, #tpu.memory_space<smem>>
    %213 = vector.broadcast %212 : f32 to vector<1x256xf32>
    %214 = arith.addf %211, %213 : vector<1x256xf32>
    %215 = arith.maximumf %210, %214 : vector<1x256xf32>
    %216 = arith.subf %210, %215 : vector<1x256xf32>
    %217 = math.exp %216 : vector<1x256xf32>
    %218 = arith.subf %214, %215 : vector<1x256xf32>
    %219 = math.exp %218 : vector<1x256xf32>
    %220 = arith.addf %217, %219 : vector<1x256xf32>
    %221 = tpu.reciprocal %220 {approx = true} : vector<1x256xf32> -> vector<1x256xf32>
    %222 = arith.mulf %217, %221 : vector<1x256xf32>
    %223 = arith.mulf %219, %221 : vector<1x256xf32>
    %224 = arith.mulf %222, %54 : vector<1x256xf32>
    %225 = arith.mulf %223, %67 : vector<1x256xf32>
    %226 = arith.addf %224, %225 : vector<1x256xf32>
    %227 = vector.broadcast %226 : vector<1x256xf32> to vector<4x256xf32>
    %228 = arith.mulf %5, %227 : vector<4x256xf32>
    %c0_54 = arith.constant 0 : index
    %229 = memref.load %arg3[%c0_54] : memref<2xf32, #tpu.memory_space<smem>>
    %230 = vector.broadcast %229 : f32 to vector<1x256xf32>
    %231 = arith.addf %101, %230 : vector<1x256xf32>
    %c1_55 = arith.constant 1 : index
    %232 = memref.load %arg3[%c1_55] : memref<2xf32, #tpu.memory_space<smem>>
    %233 = vector.broadcast %232 : f32 to vector<1x256xf32>
    %234 = arith.addf %120, %233 : vector<1x256xf32>
    %235 = arith.maximumf %231, %234 : vector<1x256xf32>
    %236 = arith.subf %231, %235 : vector<1x256xf32>
    %237 = math.exp %236 : vector<1x256xf32>
    %238 = arith.subf %234, %235 : vector<1x256xf32>
    %239 = math.exp %238 : vector<1x256xf32>
    %240 = arith.addf %237, %239 : vector<1x256xf32>
    %241 = tpu.reciprocal %240 {approx = true} : vector<1x256xf32> -> vector<1x256xf32>
    %242 = arith.mulf %237, %241 : vector<1x256xf32>
    %243 = arith.mulf %239, %241 : vector<1x256xf32>
    %244 = vector.broadcast %242 : vector<1x256xf32> to vector<4x256xf32>
    %245 = arith.mulf %244, %56 : vector<4x256xf32>
    %246 = vector.broadcast %243 : vector<1x256xf32> to vector<4x256xf32>
    %247 = arith.mulf %246, %69 : vector<4x256xf32>
    %248 = arith.addf %245, %247 : vector<4x256xf32>
    %c0_56 = arith.constant 0 : index
    %c1_57 = arith.constant 1 : index
    %c0_58 = arith.constant 0 : index
    %c0_59 = arith.constant 0 : index
    %249 = vector.load %arg6[%c0_56, %c1_57, %c0_58, %c0_59] : memref<1x4x8x256xf32, #tpu.memory_space<vmem>>, vector<1x1x4x256xf32>
    %250 = vector.shape_cast %249 : vector<1x1x4x256xf32> to vector<4x256xf32>
    %251 = vector.shape_cast %228 : vector<4x256xf32> to vector<1x1x4x256xf32>
    tpu.vector_store %arg6[%c0_56, %c1_57, %c0_58, %c0_59], %251 {strides = array<i32>} : memref<1x4x8x256xf32, #tpu.memory_space<vmem>>, vector<1x1x4x256xf32>,
    %c0_60 = arith.constant 0 : index
    %c1_61 = arith.constant 1 : index
    %c4_62 = arith.constant 4 : index
    %c0_63 = arith.constant 0 : index
    %252 = vector.load %arg6[%c0_60, %c1_61, %c4_62, %c0_63] : memref<1x4x8x256xf32, #tpu.memory_space<vmem>>, vector<1x1x4x256xf32>
    %253 = vector.shape_cast %252 : vector<1x1x4x256xf32> to vector<4x256xf32>
    %254 = vector.shape_cast %248 : vector<4x256xf32> to vector<1x1x4x256xf32>
    tpu.vector_store %arg6[%c0_60, %c1_61, %c4_62, %c0_63], %254 {strides = array<i32>} : memref<1x4x8x256xf32, #tpu.memory_space<vmem>>, vector<1x1x4x256xf32>,
    %255 = arith.mulf %67, %24 : vector<1x256xf32>
    %c0_64 = arith.constant 0 : index
    %256 = memref.load %arg3[%c0_64] : memref<2xf32, #tpu.memory_space<smem>>
    %257 = vector.broadcast %256 : f32 to vector<1x256xf32>
    %258 = arith.addf %255, %257 : vector<1x256xf32>
    %259 = arith.mulf %80, %43 : vector<1x256xf32>
    %c1_65 = arith.constant 1 : index
    %260 = memref.load %arg3[%c1_65] : memref<2xf32, #tpu.memory_space<smem>>
    %261 = vector.broadcast %260 : f32 to vector<1x256xf32>
    %262 = arith.addf %259, %261 : vector<1x256xf32>
    %263 = arith.maximumf %258, %262 : vector<1x256xf32>
    %264 = arith.subf %258, %263 : vector<1x256xf32>
    %265 = math.exp %264 : vector<1x256xf32>
    %266 = arith.subf %262, %263 : vector<1x256xf32>
    %267 = math.exp %266 : vector<1x256xf32>
    %268 = arith.addf %265, %267 : vector<1x256xf32>
    %269 = tpu.reciprocal %268 {approx = true} : vector<1x256xf32> -> vector<1x256xf32>
    %270 = arith.mulf %265, %269 : vector<1x256xf32>
    %271 = arith.mulf %267, %269 : vector<1x256xf32>
    %272 = arith.mulf %270, %67 : vector<1x256xf32>
    %273 = arith.mulf %271, %80 : vector<1x256xf32>
    %274 = arith.addf %272, %273 : vector<1x256xf32>
    %275 = vector.broadcast %274 : vector<1x256xf32> to vector<4x256xf32>
    %276 = arith.mulf %5, %275 : vector<4x256xf32>
    %c0_66 = arith.constant 0 : index
    %277 = memref.load %arg3[%c0_66] : memref<2xf32, #tpu.memory_space<smem>>
    %278 = vector.broadcast %277 : f32 to vector<1x256xf32>
    %279 = arith.addf %139, %278 : vector<1x256xf32>
    %c1_67 = arith.constant 1 : index
    %280 = memref.load %arg3[%c1_67] : memref<2xf32, #tpu.memory_space<smem>>
    %281 = vector.broadcast %280 : f32 to vector<1x256xf32>
    %282 = arith.addf %158, %281 : vector<1x256xf32>
    %283 = arith.maximumf %279, %282 : vector<1x256xf32>
    %284 = arith.subf %279, %283 : vector<1x256xf32>
    %285 = math.exp %284 : vector<1x256xf32>
    %286 = arith.subf %282, %283 : vector<1x256xf32>
    %287 = math.exp %286 : vector<1x256xf32>
    %288 = arith.addf %285, %287 : vector<1x256xf32>
    %289 = tpu.reciprocal %288 {approx = true} : vector<1x256xf32> -> vector<1x256xf32>
    %290 = arith.mulf %285, %289 : vector<1x256xf32>
    %291 = arith.mulf %287, %289 : vector<1x256xf32>
    %292 = vector.broadcast %290 : vector<1x256xf32> to vector<4x256xf32>
    %293 = arith.mulf %292, %69 : vector<4x256xf32>
    %294 = vector.broadcast %291 : vector<1x256xf32> to vector<4x256xf32>
    %295 = arith.mulf %294, %82 : vector<4x256xf32>
    %296 = arith.addf %293, %295 : vector<4x256xf32>
    %c0_68 = arith.constant 0 : index
    %c2_69 = arith.constant 2 : index
    %c0_70 = arith.constant 0 : index
    %c0_71 = arith.constant 0 : index
    %297 = vector.load %arg6[%c0_68, %c2_69, %c0_70, %c0_71] : memref<1x4x8x256xf32, #tpu.memory_space<vmem>>, vector<1x1x4x256xf32>
    %298 = vector.shape_cast %297 : vector<1x1x4x256xf32> to vector<4x256xf32>
    %299 = vector.shape_cast %276 : vector<4x256xf32> to vector<1x1x4x256xf32>
    tpu.vector_store %arg6[%c0_68, %c2_69, %c0_70, %c0_71], %299 {strides = array<i32>} : memref<1x4x8x256xf32, #tpu.memory_space<vmem>>, vector<1x1x4x256xf32>,
    %c0_72 = arith.constant 0 : index
    %c2_73 = arith.constant 2 : index
    %c4_74 = arith.constant 4 : index
    %c0_75 = arith.constant 0 : index
    %300 = vector.load %arg6[%c0_72, %c2_73, %c4_74, %c0_75] : memref<1x4x8x256xf32, #tpu.memory_space<vmem>>, vector<1x1x4x256xf32>
    %301 = vector.shape_cast %300 : vector<1x1x4x256xf32> to vector<4x256xf32>
    %302 = vector.shape_cast %296 : vector<4x256xf32> to vector<1x1x4x256xf32>
    tpu.vector_store %arg6[%c0_72, %c2_73, %c4_74, %c0_75], %302 {strides = array<i32>} : memref<1x4x8x256xf32, #tpu.memory_space<vmem>>, vector<1x1x4x256xf32>,
    %303 = arith.mulf %67, %24 : vector<1x256xf32>
    %c0_76 = arith.constant 0 : index
    %304 = memref.load %arg3[%c0_76] : memref<2xf32, #tpu.memory_space<smem>>
    %305 = vector.broadcast %304 : f32 to vector<1x256xf32>
    %306 = arith.addf %303, %305 : vector<1x256xf32>
    %307 = arith.mulf %80, %43 : vector<1x256xf32>
    %c1_77 = arith.constant 1 : index
    %308 = memref.load %arg3[%c1_77] : memref<2xf32, #tpu.memory_space<smem>>
    %309 = vector.broadcast %308 : f32 to vector<1x256xf32>
    %310 = arith.addf %307, %309 : vector<1x256xf32>
    %311 = arith.maximumf %306, %310 : vector<1x256xf32>
    %312 = arith.subf %306, %311 : vector<1x256xf32>
    %313 = math.exp %312 : vector<1x256xf32>
    %314 = arith.subf %310, %311 : vector<1x256xf32>
    %315 = math.exp %314 : vector<1x256xf32>
    %316 = arith.addf %313, %315 : vector<1x256xf32>
    %317 = tpu.reciprocal %316 {approx = true} : vector<1x256xf32> -> vector<1x256xf32>
    %318 = arith.mulf %313, %317 : vector<1x256xf32>
    %319 = arith.mulf %315, %317 : vector<1x256xf32>
    %320 = arith.mulf %318, %67 : vector<1x256xf32>
    %321 = arith.mulf %319, %80 : vector<1x256xf32>
    %322 = arith.addf %320, %321 : vector<1x256xf32>
    %323 = vector.broadcast %322 : vector<1x256xf32> to vector<4x256xf32>
    %324 = arith.mulf %5, %323 : vector<4x256xf32>
    %c0_78 = arith.constant 0 : index
    %325 = memref.load %arg3[%c0_78] : memref<2xf32, #tpu.memory_space<smem>>
    %326 = vector.broadcast %325 : f32 to vector<1x256xf32>
    %327 = arith.addf %139, %326 : vector<1x256xf32>
    %c1_79 = arith.constant 1 : index
    %328 = memref.load %arg3[%c1_79] : memref<2xf32, #tpu.memory_space<smem>>
    %329 = vector.broadcast %328 : f32 to vector<1x256xf32>
    %330 = arith.addf %158, %329 : vector<1x256xf32>
    %331 = arith.maximumf %327, %330 : vector<1x256xf32>
    %332 = arith.subf %327, %331 : vector<1x256xf32>
    %333 = math.exp %332 : vector<1x256xf32>
    %334 = arith.subf %330, %331 : vector<1x256xf32>
    %335 = math.exp %334 : vector<1x256xf32>
    %336 = arith.addf %333, %335 : vector<1x256xf32>
    %337 = tpu.reciprocal %336 {approx = true} : vector<1x256xf32> -> vector<1x256xf32>
    %338 = arith.mulf %333, %337 : vector<1x256xf32>
    %339 = arith.mulf %335, %337 : vector<1x256xf32>
    %340 = vector.broadcast %338 : vector<1x256xf32> to vector<4x256xf32>
    %341 = arith.mulf %340, %69 : vector<4x256xf32>
    %342 = vector.broadcast %339 : vector<1x256xf32> to vector<4x256xf32>
    %343 = arith.mulf %342, %82 : vector<4x256xf32>
    %344 = arith.addf %341, %343 : vector<4x256xf32>
    %c0_80 = arith.constant 0 : index
    %c3_81 = arith.constant 3 : index
    %c0_82 = arith.constant 0 : index
    %c0_83 = arith.constant 0 : index
    %345 = vector.load %arg6[%c0_80, %c3_81, %c0_82, %c0_83] : memref<1x4x8x256xf32, #tpu.memory_space<vmem>>, vector<1x1x4x256xf32>
    %346 = vector.shape_cast %345 : vector<1x1x4x256xf32> to vector<4x256xf32>
    %347 = vector.shape_cast %324 : vector<4x256xf32> to vector<1x1x4x256xf32>
    tpu.vector_store %arg6[%c0_80, %c3_81, %c0_82, %c0_83], %347 {strides = array<i32>} : memref<1x4x8x256xf32, #tpu.memory_space<vmem>>, vector<1x1x4x256xf32>,
    %c0_84 = arith.constant 0 : index
    %c3_85 = arith.constant 3 : index
    %c4_86 = arith.constant 4 : index
    %c0_87 = arith.constant 0 : index
    %348 = vector.load %arg6[%c0_84, %c3_85, %c4_86, %c0_87] : memref<1x4x8x256xf32, #tpu.memory_space<vmem>>, vector<1x1x4x256xf32>
    %349 = vector.shape_cast %348 : vector<1x1x4x256xf32> to vector<4x256xf32>
    %350 = vector.shape_cast %344 : vector<4x256xf32> to vector<1x1x4x256xf32>
    tpu.vector_store %arg6[%c0_84, %c3_85, %c4_86, %c0_87], %350 {strides = array<i32>} : memref<1x4x8x256xf32, #tpu.memory_space<vmem>>, vector<1x1x4x256xf32>,
    return
  }
  func.func @transform_0(%arg0: i32, %arg1: i32) -> i32 {
    %c0_i32 = arith.constant 0 : i32
    %c0_i32_0 = arith.constant 0 : i32
    return %c0_i32 : i32
  }
  func.func @transform_1(%arg0: i32, %arg1: i32) -> i32 {
    %c0_i32 = arith.constant 0 : i32
    %c0_i32_0 = arith.constant 0 : i32
    return %c0_i32 : i32
  }
  func.func @transform_2(%arg0: i32, %arg1: i32) -> (i32, i32, i32) {
    %c0_i32 = arith.constant 0 : i32
    %c0_i32_0 = arith.constant 0 : i32
    return %arg0, %c0_i32, %arg1 : i32, i32, i32
  }
  func.func @transform_3(%arg0: i32, %arg1: i32) -> (i32, i32, i32, i32) {
    %c0_i32 = arith.constant 0 : i32
    %c0_i32_0 = arith.constant 0 : i32
    %c0_i32_1 = arith.constant 0 : i32
    return %arg0, %c0_i32, %c0_i32_0, %arg1 : i32, i32, i32, i32
  }
  func.func @transform_4(%arg0: i32, %arg1: i32) -> (i32, i32, i32, i32) {
    %c0_i32 = arith.constant 0 : i32
    %c0_i32_0 = arith.constant 0 : i32
    %c0_i32_1 = arith.constant 0 : i32
    return %arg0, %c0_i32, %c0_i32_0, %arg1 : i32, i32, i32, i32
  }
}

</mosaic_0001>

<llo_original>
// kernel: run.1
$region0: #{run.1}
  #allocation0 [shape = 'u32[]', space=smem, size = 0x4, offset = 0x4, fixed_abs, tag = 'smem constant byte address 0x4 - core index']
  #allocation1 [shape = 'u32[144,128]{1,0:T(1,128)}', space=vmem, size = 0x12000, scoped, tag = 'internal scratch']
  %s0 = inlined_call_operand.vmem [shape: f32[8], index: 0, kind: input, shape index: {}]
  %s1 = inlined_call_operand.vmem [shape: f32[2], index: 1, kind: input, shape index: {}]
  %s2 = inlined_call_operand.vmem [shape: f32[2,4,256], index: 2, kind: input, shape index: {}]
  %s3 = inlined_call_operand.vmem [shape: f32[2,3,4,256], index: 3, kind: input, shape index: {}]
  %s4 = inlined_call_operand.vmem [shape: f32[2,4,8,256], index: 4, kind: output, shape index: {}]
  %s5 = sld [smem:[#allocation0]]
  $region57: #{run.1} parent=0
    _
  %s7 = ssub.s32 1, %s5
  %s8 = scalar_select 0, %s7, %s5
  $region1: #{run.1} parent=0
    #allocation2 [shape = 'u8[512]{0}', space=smem, size = 0x200, scoped, tag = 'input window, operand 0, single buffered']
    #allocation3 [shape = 's32[2]{0}', space=sflag, size = 0x8, scoped, tag = 'scoped memory for run.1']
    #allocation4 [shape = 'u8[512]{0}', space=smem, size = 0x200, scoped, tag = 'input window, operand 1, single buffered']
    #allocation5 [shape = 's32[1]{0}', space=sflag, size = 0x4, scoped, tag = 'scoped memory for run.1']
    %9 = vsyncpa [#allocation3], 0
    %10 = vsyncpa [#allocation5], 0
    loop: start=0, step=1, limit=4
    $region2: #{run.1} parent=1 // loop_pre_header
      _
    $region3: #{run.1} parent=1 // loop_header
      %s12 = sphi 0, %s16
      %p13 = scmp.ge.s32.totalorder %s12, 4
      %s19 = sphi 0, %s31
      %s20 = sphi 0, %s27
      %s21 = sphi 0, %s19
      %s22 = sphi 0, %s20
      %s23 = sphi 0, %s21
      %s24 = sphi 0, %s22
      %s32 = sphi 0, %s32
      %s34 = sphi 0, %s32
      %s35 = sphi 0, %s34
      %s49 = sphi 0, %s35
      %s53 = sphi 0, %s53
      %s55 = sphi 0, %s53
      %s56 = sphi 0, %s55
      %s70 = sphi 0, %s56
      %s78 = sphi 0, %s80
      %s81 = sphi 0, %s78
      %s82 = sphi 0, %s81
      %s98 = sphi 0, %s82
      %s106 = sphi 0, %s108
      %s109 = sphi 0, %s106
      %s110 = sphi 0, %s109
      %s126 = sphi 0, %s110
      %s134 = sphi 0, %s136
      %s137 = sphi 0, %s134
      %s138 = sphi 0, %s137
      %s154 = sphi 0, %s138
    $region4: #{run.1} parent=1 // loop_header_branch
      %15 = sbr.rel (%p13) target = $region8
    $region5: #{run.1} parent=1 // loop_body
      %s17 = ssub.s32 %s12, 1
      %s18 = ssub.s32 %s12, 2
      %s25 = sadd.s32 1, %s20
      %p26 = scmp.ge.s32.totalorder %s25, 1
      %s27 = scalar_select %p26, 0, %s25
      %s28 = sadd.s32 1, %s19
      %s29 = scalar_select %p26, %s28, %s19
      %p30 = scmp.ge.s32.totalorder %s29, 2
      %s31 = scalar_select %p30, 0, %s29
      %s33 = sadd.s32 %s32, 1
      %p36 = scmp.eq.s32.totalorder %s12, 1
      %p37 = scmp.ne.s32.totalorder %s32, %s34
      %p38 = scmp.eq.s32.totalorder %s12, 0
      %p39 = por %p37, %p38
      %p40 = scmp.ne.s32.totalorder %s32, %s34
      %p41 = scmp.eq.s32.totalorder %s17, 1
      %p42 = por %p40, %p41
      %p43 = scmp.ne.s32.totalorder %s34, %s35
      %p44 = scmp.eq.s32.totalorder %s17, 0
      %p45 = por %p43, %p44
      %p46 = scmp.ne.s32.totalorder %s34, %s35
      %p47 = scmp.eq.s32.totalorder %s18, 1
      %p48 = por %p46, %p47
      %p50 = scmp.ne.s32.totalorder %s35, %s49
      %p51 = scmp.eq.s32.totalorder %s18, 0
      %p52 = por %p50, %p51
      %s54 = sadd.s32 %s53, 1
      %p57 = scmp.eq.s32.totalorder %s12, 1
      %p58 = scmp.ne.s32.totalorder %s53, %s55
      %p59 = scmp.eq.s32.totalorder %s12, 0
      %p60 = por %p58, %p59
      %p61 = scmp.ne.s32.totalorder %s53, %s55
      %p62 = scmp.eq.s32.totalorder %s17, 1
      %p63 = por %p61, %p62
      %p64 = scmp.ne.s32.totalorder %s55, %s56
      %p65 = scmp.eq.s32.totalorder %s17, 0
      %p66 = por %p64, %p65
      %p67 = scmp.ne.s32.totalorder %s55, %s56
      %p68 = scmp.eq.s32.totalorder %s18, 1
      %p69 = por %p67, %p68
      %p71 = scmp.ne.s32.totalorder %s56, %s70
      %p72 = scmp.eq.s32.totalorder %s18, 0
      %p73 = por %p71, %p72
      %s74 = ssub.s32 %s19, %s31
      %s75 = ssub.s32 %s20, %s27
      %s76 = sor.u32 %s74, %s75
      %p77 = scmp.eq.s32.totalorder %s76, 0
      %s79 = sadd.s32 %s78, 1
      %s80 = scalar_select %p77, %s78, %s79
      %p83 = pneg %p77
      %p84 = scmp.eq.s32.totalorder %s12, 1
      %p85 = por %p83, %p84
      %p86 = scmp.ne.s32.totalorder %s78, %s81
      %p87 = scmp.eq.s32.totalorder %s12, 0
      %p88 = por %p86, %p87
      %p89 = scmp.ne.s32.totalorder %s78, %s81
      %p90 = scmp.eq.s32.totalorder %s17, 1
      %p91 = por %p89, %p90
      %p92 = scmp.ne.s32.totalorder %s81, %s82
      %p93 = scmp.eq.s32.totalorder %s17, 0
      %p94 = por %p92, %p93
      %p95 = scmp.ne.s32.totalorder %s81, %s82
      %p96 = scmp.eq.s32.totalorder %s18, 1
      %p97 = por %p95, %p96
      %p99 = scmp.ne.s32.totalorder %s82, %s98
      %p100 = scmp.eq.s32.totalorder %s18, 0
      %p101 = por %p99, %p100
      %s102 = ssub.s32 %s19, %s31
      %s103 = ssub.s32 %s20, %s27
      %s104 = sor.u32 %s102, %s103
      %p105 = scmp.eq.s32.totalorder %s104, 0
      %s107 = sadd.s32 %s106, 1
      %s108 = scalar_select %p105, %s106, %s107
      %p111 = pneg %p105
      %p112 = scmp.eq.s32.totalorder %s12, 1
      %p113 = por %p111, %p112
      %p114 = scmp.ne.s32.totalorder %s106, %s109
      %p115 = scmp.eq.s32.totalorder %s12, 0
      %p116 = por %p114, %p115
      %p117 = scmp.ne.s32.totalorder %s106, %s109
      %p118 = scmp.eq.s32.totalorder %s17, 1
      %p119 = por %p117, %p118
      %p120 = scmp.ne.s32.totalorder %s109, %s110
      %p121 = scmp.eq.s32.totalorder %s17, 0
      %p122 = por %p120, %p121
      %p123 = scmp.ne.s32.totalorder %s109, %s110
      %p124 = scmp.eq.s32.totalorder %s18, 1
      %p125 = por %p123, %p124
      %p127 = scmp.ne.s32.totalorder %s110, %s126
      %p128 = scmp.eq.s32.totalorder %s18, 0
      %p129 = por %p127, %p128
      %s130 = ssub.s32 %s19, %s31
      %s131 = ssub.s32 %s20, %s27
      %s132 = sor.u32 %s130, %s131
      %p133 = scmp.eq.s32.totalorder %s132, 0
      %s135 = sadd.s32 %s134, 1
      %s136 = scalar_select %p133, %s134, %s135
      %p139 = pneg %p133
      %p140 = scmp.eq.s32.totalorder %s12, 1
      %p141 = por %p139, %p140
      %p142 = scmp.ne.s32.totalorder %s134, %s137
      %p143 = scmp.eq.s32.totalorder %s12, 0
      %p144 = por %p142, %p143
      %p145 = scmp.ne.s32.totalorder %s134, %s137
      %p146 = scmp.eq.s32.totalorder %s17, 1
      %p147 = por %p145, %p146
      %p148 = scmp.ne.s32.totalorder %s137, %s138
      %p149 = scmp.eq.s32.totalorder %s17, 0
      %p150 = por %p148, %p149
      %p151 = scmp.ne.s32.totalorder %s137, %s138
      %p152 = scmp.eq.s32.totalorder %s18, 1
      %p153 = por %p151, %p152
      %p155 = scmp.ne.s32.totalorder %s138, %s154
      %p156 = scmp.eq.s32.totalorder %s18, 0
      %p157 = por %p155, %p156
      %p158 = scmp.le.s32.totalorder 1, %s12
      %p159 = scmp.lt.s32.totalorder %s12, 3
      %p160 = pnand %p158, %p159
      %p161 = pneg %p160
      // Predicated region
      $region9: #{run.1} parent=5 // pred_check
        _
      $region10: #{run.1} parent=5 // pred_check_branch
        %163 = sbr.rel (%p160) target = $region12
      $region11: #{run.1} parent=5 // pred_region
        %s164 = ssub.s32 %s12, 1
        // Predicated region
        $region13: #{run.1} parent=11 // pred_check
          %p165 = pneg %p45
        $region14: #{run.1} parent=11 // pred_check_branch
          %167 = sbr.rel (%p165) target = $region16
        $region15: #{run.1} parent=11 // pred_region
          %s169 = ssub.s32 16, 16
          %170 = vsyncadd [#allocation3], %s169
          %s172 = sshll.u32 %s0, 4
          %s173 = int_to_ptr.vmem [resolvable:$true] %s172
          %175 = dma.vmem_to_smem %s173, 16, [#allocation2], [#allocation3]
        $region16: #{run.1} parent=11 // pred_fallthru
          _
        // Predicated region
        $region17: #{run.1} parent=11 // pred_check
          %p176 = pneg %p66
        $region18: #{run.1} parent=11 // pred_check_branch
          %178 = sbr.rel (%p176) target = $region20
        $region19: #{run.1} parent=11 // pred_region
          %s180 = ssub.s32 16, 16
          %181 = vsyncadd [#allocation5], %s180
          %s183 = sshll.u32 %s1, 4
          %s184 = int_to_ptr.vmem [resolvable:$true] %s183
          %186 = dma.vmem_to_smem %s184, 16, [#allocation4], [#allocation5]
        $region20: #{run.1} parent=11 // pred_fallthru
          _
      $region12: #{run.1} parent=5 // pred_fallthru
        _
      %p187 = scmp.lt.s32.totalorder %s12, 2
      // Predicated region
      $region21: #{run.1} parent=5 // pred_check
        %p188 = pneg %p187
      $region22: #{run.1} parent=5 // pred_check_branch
        %190 = sbr.rel (%p188) target = $region24
      $region23: #{run.1} parent=5 // pred_region
        // Predicated region
        $region25: #{run.1} parent=23 // pred_check
          %p191 = pneg %p88
        $region26: #{run.1} parent=23 // pred_check_branch
          %193 = sbr.rel (%p191) target = $region28
        $region27: #{run.1} parent=23 // pred_region
          %s194 = smul.u32 2, %s20
          %p195 = scmp.lt.s32.totalorder %s19, 1
          %s196 = scalar_select %p195, %s19, 1
          %p197 = scmp.lt.s32.totalorder %s194, 1
          %s198 = scalar_select %p197, %s194, 1
          %s199 = smul.addr %s196, 2
          %s200 = sadd.s32 %s198, %s199
          %s201 = smul.addr %s200, 4
          %s202 = scalar_lea.vmem %s2, %s201
          %s203 = smul.u32 2, %s20
        $region28: #{run.1} parent=23 // pred_fallthru
          _
        // Predicated region
        $region29: #{run.1} parent=23 // pred_check
          %p204 = pneg %p116
        $region30: #{run.1} parent=23 // pred_check_branch
          %206 = sbr.rel (%p204) target = $region32
        $region31: #{run.1} parent=23 // pred_region
          %s207 = smul.u32 2, %s20
          %p208 = scmp.lt.s32.totalorder %s19, 1
          %s209 = scalar_select %p208, %s19, 1
          %p210 = scmp.lt.s32.totalorder %s207, 1
          %s211 = scalar_select %p210, %s207, 1
          %s212 = smul.addr %s209, 6
          %s213 = sadd.s32 %s211, %s212
          %s214 = smul.addr %s213, 4
          %s215 = scalar_lea.vmem %s3, %s214
          %s216 = smul.u32 2, %s20
        $region32: #{run.1} parent=23 // pred_fallthru
          _
      $region24: #{run.1} parent=5 // pred_fallthru
        _
      %p217 = scmp.le.s32.totalorder 1, %s12
      %p218 = scmp.lt.s32.totalorder %s12, 3
      %p219 = pnand %p217, %p218
      %p220 = pneg %p219
      // Predicated region
      $region33: #{run.1} parent=5 // pred_check
        _
      $region34: #{run.1} parent=5 // pred_check_branch
        %222 = sbr.rel (%p219) target = $region36
      $region35: #{run.1} parent=5 // pred_region
        %s223 = ssub.s32 %s12, 1
        // Predicated region
        $region37: #{run.1} parent=35 // pred_check
          %p224 = pneg %p45
        $region38: #{run.1} parent=35 // pred_check_branch
          %226 = sbr.rel (%p224) target = $region40
        $region39: #{run.1} parent=35 // pred_region
          %227 = dma.done [#allocation3], 16
        $region40: #{run.1} parent=35 // pred_fallthru
          _
        // Predicated region
        $region41: #{run.1} parent=35 // pred_check
          %p228 = pneg %p66
        $region42: #{run.1} parent=35 // pred_check_branch
          %230 = sbr.rel (%p228) target = $region44
        $region43: #{run.1} parent=35 // pred_region
          %231 = dma.done [#allocation5], 16
        $region44: #{run.1} parent=35 // pred_fallthru
          _
        %232 = sfence
        %p233 = pneg %p45
        %p234 = pneg %p42
        %p235 = pneg %p66
        %p236 = pneg %p63
        %s237 = smul.u32 2, %s22
        %p238 = scmp.lt.s32.totalorder %s21, 1
        %s239 = scalar_select %p238, %s21, 1
        %p240 = scmp.lt.s32.totalorder %s237, 1
        %s241 = scalar_select %p240, %s237, 1
        %s242 = smul.addr %s239, 2
        %s243 = sadd.s32 %s241, %s242
        %s244 = smul.addr %s243, 4
        %s245 = scalar_lea.vmem %s2, %s244
        %p246 = pneg %p94
        %p247 = pneg %p91
        %s248 = smul.u32 2, %s22
        %p249 = scmp.lt.s32.totalorder %s21, 1
        %s250 = scalar_select %p249, %s21, 1
        %p251 = scmp.lt.s32.totalorder %s248, 1
        %s252 = scalar_select %p251, %s248, 1
        %s253 = smul.addr %s250, 6
        %s254 = sadd.s32 %s252, %s253
        %s255 = smul.addr %s254, 4
        %s256 = scalar_lea.vmem %s3, %s255
        %p257 = pneg %p122
        %p258 = pneg %p119
        %p259 = pneg %p150
        %p260 = pneg %p147
        %s261 = smul.u32 2, %s22
        %p262 = scmp.lt.s32.totalorder %s21, 1
        %s263 = scalar_select %p262, %s21, 1
        %p264 = scmp.lt.s32.totalorder %s261, 1
        %s265 = scalar_select %p264, %s261, 1
        %s266 = smul.addr %s263, 8
        %s267 = sadd.s32 %s265, %s266
        %s268 = smul.addr %s267, 8
        %s269 = scalar_lea.vmem %s4, %s268
        %s270 = smul.u32 2, %s22
        %p271 = scmp.lt.s32.totalorder %s21, 1
        %s272 = scalar_select %p271, %s21, 1
        %p273 = scmp.lt.s32.totalorder %s270, 1
        %s274 = scalar_select %p273, %s270, 1
        %s275 = smul.addr %s272, 2
        %s276 = sadd.s32 %s274, %s275
        %s277 = smul.addr %s276, 4
        %s278 = scalar_lea.vmem %s2, %s277
        %s279 = smul.u32 2, %s22
        %s280 = smul.u32 2, %s22
        %p281 = scmp.lt.s32.totalorder %s21, 1
        %s282 = scalar_select %p281, %s21, 1
        %p283 = scmp.lt.s32.totalorder %s280, 1
        %s284 = scalar_select %p283, %s280, 1
        %s285 = smul.addr %s282, 6
        %s286 = sadd.s32 %s284, %s285
        %s287 = smul.addr %s286, 4
        %s288 = scalar_lea.vmem %s3, %s287
        %s289 = smul.u32 2, %s22
        %s290 = smul.u32 2, %s22
        %p291 = scmp.lt.s32.totalorder %s21, 1
        %s292 = scalar_select %p291, %s21, 1
        %p293 = scmp.lt.s32.totalorder %s290, 1
        %s294 = scalar_select %p293, %s290, 1
        %s295 = smul.addr %s292, 8
        %s296 = sadd.s32 %s294, %s295
        %s297 = smul.addr %s296, 8
        %s298 = scalar_lea.vmem %s4, %s297
        %s299 = smul.u32 2, %s22
        %v300 = vlaneseq
        %v301 = vand.u32 %v300, 127
        %v302 = vadd.s32 %v301, 128
        %s303 = smul.u32 %s22, 256
        %v304 = vstv %s303
        %v305 = vadd.s32 %v301, %v304
        %v306 = vadd.s32 %v302, %v304
        %v307 = vld [vmem:[%s278] sm:$0xff]
        %s308 = sld [smem:[#allocation2]]
        %v309 = vstv %s308
        %v310 = vmul.f32 %v309, %v307
        %s311 = sld [smem:[#allocation2 + $0x1]]
        %v312 = vstv %s311
        %v313 = vmul.f32 %v312, %v307
        %v315 = vrot.slane %v313, 5
        %v316 = vrot.slane %v315, 4
        %v318 = vadd.f32 %v310, %v316
        %s319 = sld [smem:[#allocation2 + $0x2]]
        %v320 = vstv %s319
        %v321 = vmul.f32 %v320, %v307
        %v323 = vrot.slane %v321, 6
        %v324 = vrot.slane %v323, 4
        %v326 = vadd.f32 %v318, %v324
        %s327 = sld [smem:[#allocation2 + $0x3]]
        %v328 = vstv %s327
        %v329 = vmul.f32 %v328, %v307
        %v331 = vrot.slane %v329, 7
        %v332 = vrot.slane %v331, 4
        %v334 = vadd.f32 %v326, %v332
        %s335 = sld [smem:[#allocation2 + $0x4]]
        %v336 = vstv %s335
        %v337 = vmul.f32 %v336, %v307
        %s338 = sld [smem:[#allocation2 + $0x5]]
        %v339 = vstv %s338
        %v340 = vmul.f32 %v339, %v307
        %v342 = vrot.slane %v340, 5
        %v343 = vrot.slane %v342, 4
        %v345 = vadd.f32 %v337, %v343
        %s346 = sld [smem:[#allocation2 + $0x6]]
        %v347 = vstv %s346
        %v348 = vmul.f32 %v347, %v307
        %v350 = vrot.slane %v348, 6
        %v351 = vrot.slane %v350, 4
        %v353 = vadd.f32 %v345, %v351
        %s354 = sld [smem:[#allocation2 + $0x7]]
        %v355 = vstv %s354
        %v356 = vmul.f32 %v355, %v307
        %v358 = vrot.slane %v356, 7
        %v359 = vrot.slane %v358, 4
        %v361 = vadd.f32 %v353, %v359
        %v362 = vadd.s32 %v305, 4294967280
        %v363 = vadd.s32 %v306, 4294967280
        %vm364 = vcmp.ge.s32.totalorder %v362, 0
        %vm365 = vcmp.ge.s32.totalorder %v363, 0
        %vm366 = vcmp.lt.s32.totalorder %v362, 256
        %vm367 = vcmp.lt.s32.totalorder %v363, 256
        %vm368 = vmand %vm364, %vm366
        %vm369 = vmand %vm365, %vm367
        %v370 = vsel %vm368, 1, 0
        %v371 = vsel %vm369, 1, 0
        %v372 = vcvt.s32.f32 %v370
        %v373 = vcvt.s32.f32 %v371
        %v374 = vld [vmem:[%s288] sm:$0xff]
        %vm375 = vcmp.ge.s32.totalorder %v305, 0
        %vm376 = vcmp.ge.s32.totalorder %v306, 0
        %vm377 = vcmp.lt.s32.totalorder %v305, 256
        %vm378 = vcmp.lt.s32.totalorder %v306, 256
        %vm379 = vmand %vm375, %vm377
        %vm380 = vmand %vm376, %vm378
        %v381 = vsel %vm379, 1, 0
        %v382 = vsel %vm380, 1, 0
        %v383 = vcvt.s32.f32 %v381
        %v384 = vcvt.s32.f32 %v382
        %s385 = scalar_lea.vmem %s288, 8
        %v386 = vld [vmem:[%s385] sm:$0xff]
        %v387 = vadd.s32 %v305, 16
        %v388 = vadd.s32 %v306, 16
        %vm389 = vcmp.ge.s32.totalorder %v387, 0
        %vm390 = vcmp.ge.s32.totalorder %v388, 0
        %vm391 = vcmp.lt.s32.totalorder %v387, 256
        %vm392 = vcmp.lt.s32.totalorder %v388, 256
        %vm393 = vmand %vm389, %vm391
        %vm394 = vmand %vm390, %vm392
        %v395 = vsel %vm393, 1, 0
        %v396 = vsel %vm394, 1, 0
        %v397 = vcvt.s32.f32 %v395
        %v398 = vcvt.s32.f32 %v396
        %s399 = scalar_lea.vmem %s288, 16
        %v400 = vld [vmem:[%s399] sm:$0xff]
        %v401 = vmul.f32 %v309, %v374
        %v402 = vmul.f32 %v312, %v374
        %v404 = vrot.slane %v402, 5
        %v405 = vrot.slane %v404, 4
        %v407 = vadd.f32 %v401, %v405
        %v408 = vmul.f32 %v320, %v374
        %v410 = vrot.slane %v408, 6
        %v411 = vrot.slane %v410, 4
        %v413 = vadd.f32 %v407, %v411
        %v414 = vmul.f32 %v328, %v374
        %v416 = vrot.slane %v414, 7
        %v417 = vrot.slane %v416, 4
        %v419 = vadd.f32 %v413, %v417
        %v420 = vmul.f32 %v336, %v386
        %v421 = vmul.f32 %v339, %v386
        %v423 = vrot.slane %v421, 5
        %v424 = vrot.slane %v423, 4
        %v426 = vadd.f32 %v420, %v424
        %v427 = vmul.f32 %v347, %v386
        %v429 = vrot.slane %v427, 6
        %v430 = vrot.slane %v429, 4
        %v432 = vadd.f32 %v426, %v430
        %v433 = vmul.f32 %v355, %v386
        %v435 = vrot.slane %v433, 7
        %v436 = vrot.slane %v435, 4
        %v438 = vadd.f32 %v432, %v436
        %v439 = vmul.f32 %v309, %v386
        %v440 = vmul.f32 %v312, %v386
        %v442 = vrot.slane %v440, 5
        %v443 = vrot.slane %v442, 4
        %v445 = vadd.f32 %v439, %v443
        %v446 = vmul.f32 %v320, %v386
        %v448 = vrot.slane %v446, 6
        %v449 = vrot.slane %v448, 4
        %v451 = vadd.f32 %v445, %v449
        %v452 = vmul.f32 %v328, %v386
        %v454 = vrot.slane %v452, 7
        %v455 = vrot.slane %v454, 4
        %v457 = vadd.f32 %v451, %v455
        %v458 = vmul.f32 %v336, %v400
        %v459 = vmul.f32 %v339, %v400
        %v461 = vrot.slane %v459, 5
        %v462 = vrot.slane %v461, 4
        %v464 = vadd.f32 %v458, %v462
        %v465 = vmul.f32 %v347, %v400
        %v467 = vrot.slane %v465, 6
        %v468 = vrot.slane %v467, 4
        %v470 = vadd.f32 %v464, %v468
        %v471 = vmul.f32 %v355, %v400
        %v473 = vrot.slane %v471, 7
        %v474 = vrot.slane %v473, 4
        %v476 = vadd.f32 %v470, %v474
        %v478 = vlaneseq
        %v479 = vshrl.u32 %v478, 7
        %v480 = vsub.s32 0, %v479
        %v481 = vrot.slane %v334, %v480
        %v482 = vlaneseq
        %v483 = vshrl.u32 %v482, 7
        %v484 = vsub.s32 4, %v483
        %v485 = vrot.slane %v334, %v484
        %v488 = vmul.f32 %v372, %v481
        %v489 = vmul.f32 %v373, %v485
        %s490 = sld [smem:[#allocation4]]
        %v491 = vstv %s490
        %v492 = vadd.f32 %v488, %v491
        %v493 = vadd.f32 %v489, %v491
        %v495 = vlaneseq
        %v496 = vshrl.u32 %v495, 7
        %v497 = vsub.s32 0, %v496
        %v498 = vrot.slane %v361, %v497
        %v499 = vlaneseq
        %v500 = vshrl.u32 %v499, 7
        %v501 = vsub.s32 4, %v500
        %v502 = vrot.slane %v361, %v501
        %v505 = vmul.f32 %v383, %v498
        %v506 = vmul.f32 %v384, %v502
        %s507 = sld [smem:[#allocation4 + $0x1]]
        %v508 = vstv %s507
        %v509 = vadd.f32 %v505, %v508
        %v510 = vadd.f32 %v506, %v508
        %v511 = vmax.f32 %v492, %v509
        %v512 = vmax.f32 %v493, %v510
        %v513 = vsub.f32 %v492, %v511
        %v514 = vsub.f32 %v493, %v512
        %v515 = vmul.f32 %v513, 1.442695
        %v516 = vpow.pop %v515
        %v517 = vmul.f32 %v514, 1.442695
        %v518 = vpow.pop %v517
        %v519 = vsub.f32 %v509, %v511
        %v520 = vsub.f32 %v510, %v512
        %v521 = vmul.f32 %v519, 1.442695
        %v522 = vpow.pop %v521
        %v523 = vmul.f32 %v520, 1.442695
        %v524 = vpow.pop %v523
        %v525 = vadd.f32 %v516, %v522
        %v526 = vadd.f32 %v518, %v524
        %v527 = vrcp.pop %v525
        %v528 = vrcp.pop %v526
        %v529 = vmul.f32 %v516, %v527
        %v530 = vmul.f32 %v518, %v528
        %v531 = vmul.f32 %v522, %v527
        %v532 = vmul.f32 %v524, %v528
        %v533 = vmul.f32 %v529, %v372
        %v534 = vmul.f32 %v530, %v373
        %v535 = vmul.f32 %v531, %v383
        %v536 = vmul.f32 %v532, %v384
        %v537 = vadd.f32 %v533, %v535
        %v538 = vadd.f32 %v534, %v536
        %v539 = vlaneseq
        %v540 = vshrl.u32 %v539, 7
        %v541 = vsub.s32 0, %v540
        %v542 = vrot.slane %v537, %v541
        %v543 = vlaneseq
        %v544 = vshrl.u32 %v543, 7
        %v545 = vsub.s32 0, %v544
        %v546 = vrot.slane %v538, %v545
        %v549 = vcombine.low %v542, %v546
        %v551 = vmul.f32 %v307, %v549
        %v552 = vadd.f32 %v419, %v491
        %v553 = vadd.f32 %v438, %v508
        %v554 = vmax.f32 %v552, %v553
        %v555 = vsub.f32 %v552, %v554
        %v556 = vmul.f32 %v555, 1.442695
        %v557 = vpow.pop %v556
        %v558 = vsub.f32 %v553, %v554
        %v559 = vmul.f32 %v558, 1.442695
        %v560 = vpow.pop %v559
        %v561 = vadd.f32 %v557, %v560
        %v562 = vrcp.pop %v561
        %v563 = vmul.f32 %v557, %v562
        %v564 = vmul.f32 %v560, %v562
        %v566 = vlaneseq
        %v567 = vshrl.u32 %v566, 7
        %v568 = vsub.s32 0, %v567
        %v569 = vrot.slane %v563, %v568
        %v570 = vlaneseq
        %v571 = vshrl.u32 %v570, 7
        %v572 = vsub.s32 4, %v571
        %v573 = vrot.slane %v563, %v572
        %v576 = vlaneseq
        %v577 = vshrl.u32 %v576, 7
        %v578 = vsub.s32 0, %v577
        %v579 = vrot.slane %v569, %v578
        %v580 = vlaneseq
        %v581 = vshrl.u32 %v580, 7
        %v582 = vsub.s32 0, %v581
        %v583 = vrot.slane %v573, %v582
        %v585 = vcombine.high %v374, %v374
        %v587 = vmul.f32 %v579, %v374
        %v588 = vmul.f32 %v583, %v585
        %v590 = vlaneseq
        %v591 = vshrl.u32 %v590, 7
        %v592 = vsub.s32 0, %v591
        %v593 = vrot.slane %v564, %v592
        %v594 = vlaneseq
        %v595 = vshrl.u32 %v594, 7
        %v596 = vsub.s32 4, %v595
        %v597 = vrot.slane %v564, %v596
        %v600 = vlaneseq
        %v601 = vshrl.u32 %v600, 7
        %v602 = vsub.s32 0, %v601
        %v603 = vrot.slane %v593, %v602
        %v604 = vlaneseq
        %v605 = vshrl.u32 %v604, 7
        %v606 = vsub.s32 0, %v605
        %v607 = vrot.slane %v597, %v606
        %v609 = vcombine.high %v386, %v386
        %v611 = vmul.f32 %v603, %v386
        %v612 = vmul.f32 %v607, %v609
        %v613 = vadd.f32 %v587, %v611
        %v614 = vadd.f32 %v588, %v612
        %v616 = vcombine.high %v551, %v551
        %618 = vst [vmem:[%s298] sm:$0xf] %v551
        %619 = vst [vmem:[%s298 + $0x8] sm:$0xf] %v616
        %v622 = vrot.slane %v613, 4
        %v623 = vrot.slane %v614, 4
        %626 = vst [vmem:[%s298] sm:$0xf0] %v622
        %627 = vst [vmem:[%s298 + $0x8] sm:$0xf0] %v623
        %s628 = sld [smem:[#allocation4]]
        %v629 = vstv %s628
        %v630 = vadd.f32 %v488, %v629
        %v631 = vadd.f32 %v489, %v629
        %s632 = sld [smem:[#allocation4 + $0x1]]
        %v633 = vstv %s632
        %v634 = vadd.f32 %v505, %v633
        %v635 = vadd.f32 %v506, %v633
        %v636 = vmax.f32 %v630, %v634
        %v637 = vmax.f32 %v631, %v635
        %v638 = vsub.f32 %v630, %v636
        %v639 = vsub.f32 %v631, %v637
        %v640 = vmul.f32 %v638, 1.442695
        %v641 = vpow.pop %v640
        %v642 = vmul.f32 %v639, 1.442695
        %v643 = vpow.pop %v642
        %v644 = vsub.f32 %v634, %v636
        %v645 = vsub.f32 %v635, %v637
        %v646 = vmul.f32 %v644, 1.442695
        %v647 = vpow.pop %v646
        %v648 = vmul.f32 %v645, 1.442695
        %v649 = vpow.pop %v648
        %v650 = vadd.f32 %v641, %v647
        %v651 = vadd.f32 %v643, %v649
        %v652 = vrcp.pop %v650
        %v653 = vrcp.pop %v651
        %v654 = vmul.f32 %v641, %v652
        %v655 = vmul.f32 %v643, %v653
        %v656 = vmul.f32 %v647, %v652
        %v657 = vmul.f32 %v649, %v653
        %v658 = vmul.f32 %v654, %v372
        %v659 = vmul.f32 %v655, %v373
        %v660 = vmul.f32 %v656, %v383
        %v661 = vmul.f32 %v657, %v384
        %v662 = vadd.f32 %v658, %v660
        %v663 = vadd.f32 %v659, %v661
        %v664 = vlaneseq
        %v665 = vshrl.u32 %v664, 7
        %v666 = vsub.s32 0, %v665
        %v667 = vrot.slane %v662, %v666
        %v668 = vlaneseq
        %v669 = vshrl.u32 %v668, 7
        %v670 = vsub.s32 0, %v669
        %v671 = vrot.slane %v663, %v670
        %v674 = vcombine.low %v667, %v671
        %v676 = vmul.f32 %v307, %v674
        %v677 = vadd.f32 %v419, %v629
        %v678 = vadd.f32 %v438, %v633
        %v679 = vmax.f32 %v677, %v678
        %v680 = vsub.f32 %v677, %v679
        %v681 = vmul.f32 %v680, 1.442695
        %v682 = vpow.pop %v681
        %v683 = vsub.f32 %v678, %v679
        %v684 = vmul.f32 %v683, 1.442695
        %v685 = vpow.pop %v684
        %v686 = vadd.f32 %v682, %v685
        %v687 = vrcp.pop %v686
        %v688 = vmul.f32 %v682, %v687
        %v689 = vmul.f32 %v685, %v687
        %v691 = vlaneseq
        %v692 = vshrl.u32 %v691, 7
        %v693 = vsub.s32 0, %v692
        %v694 = vrot.slane %v688, %v693
        %v695 = vlaneseq
        %v696 = vshrl.u32 %v695, 7
        %v697 = vsub.s32 4, %v696
        %v698 = vrot.slane %v688, %v697
        %v701 = vlaneseq
        %v702 = vshrl.u32 %v701, 7
        %v703 = vsub.s32 0, %v702
        %v704 = vrot.slane %v694, %v703
        %v705 = vlaneseq
        %v706 = vshrl.u32 %v705, 7
        %v707 = vsub.s32 0, %v706
        %v708 = vrot.slane %v698, %v707
        %v709 = vmul.f32 %v704, %v374
        %v710 = vmul.f32 %v708, %v585
        %v712 = vlaneseq
        %v713 = vshrl.u32 %v712, 7
        %v714 = vsub.s32 0, %v713
        %v715 = vrot.slane %v689, %v714
        %v716 = vlaneseq
        %v717 = vshrl.u32 %v716, 7
        %v718 = vsub.s32 4, %v717
        %v719 = vrot.slane %v689, %v718
        %v722 = vlaneseq
        %v723 = vshrl.u32 %v722, 7
        %v724 = vsub.s32 0, %v723
        %v725 = vrot.slane %v715, %v724
        %v726 = vlaneseq
        %v727 = vshrl.u32 %v726, 7
        %v728 = vsub.s32 0, %v727
        %v729 = vrot.slane %v719, %v728
        %v730 = vmul.f32 %v725, %v386
        %v731 = vmul.f32 %v729, %v609
        %v732 = vadd.f32 %v709, %v730
        %v733 = vadd.f32 %v710, %v731
        %v735 = vcombine.high %v676, %v676
        %s737 = scalar_lea.vmem %s298, 16
        %738 = vst [vmem:[%s737] sm:$0xf] %v676
        %739 = vst [vmem:[%s737 + $0x8] sm:$0xf] %v735
        %v742 = vrot.slane %v732, 4
        %v743 = vrot.slane %v733, 4
        %746 = vst [vmem:[%s737] sm:$0xf0] %v742
        %747 = vst [vmem:[%s737 + $0x8] sm:$0xf0] %v743
        %v748 = vmul.f32 %v383, %v481
        %v749 = vmul.f32 %v384, %v485
        %s750 = sld [smem:[#allocation4]]
        %v751 = vstv %s750
        %v752 = vadd.f32 %v748, %v751
        %v753 = vadd.f32 %v749, %v751
        %v754 = vmul.f32 %v397, %v498
        %v755 = vmul.f32 %v398, %v502
        %s756 = sld [smem:[#allocation4 + $0x1]]
        %v757 = vstv %s756
        %v758 = vadd.f32 %v754, %v757
        %v759 = vadd.f32 %v755, %v757
        %v760 = vmax.f32 %v752, %v758
        %v761 = vmax.f32 %v753, %v759
        %v762 = vsub.f32 %v752, %v760
        %v763 = vsub.f32 %v753, %v761
        %v764 = vmul.f32 %v762, 1.442695
        %v765 = vpow.pop %v764
        %v766 = vmul.f32 %v763, 1.442695
        %v767 = vpow.pop %v766
        %v768 = vsub.f32 %v758, %v760
        %v769 = vsub.f32 %v759, %v761
        %v770 = vmul.f32 %v768, 1.442695
        %v771 = vpow.pop %v770
        %v772 = vmul.f32 %v769, 1.442695
        %v773 = vpow.pop %v772
        %v774 = vadd.f32 %v765, %v771
        %v775 = vadd.f32 %v767, %v773
        %v776 = vrcp.pop %v774
        %v777 = vrcp.pop %v775
        %v778 = vmul.f32 %v765, %v776
        %v779 = vmul.f32 %v767, %v777
        %v780 = vmul.f32 %v771, %v776
        %v781 = vmul.f32 %v773, %v777
        %v782 = vmul.f32 %v778, %v383
        %v783 = vmul.f32 %v779, %v384
        %v784 = vmul.f32 %v780, %v397
        %v785 = vmul.f32 %v781, %v398
        %v786 = vadd.f32 %v782, %v784
        %v787 = vadd.f32 %v783, %v785
        %v788 = vlaneseq
        %v789 = vshrl.u32 %v788, 7
        %v790 = vsub.s32 0, %v789
        %v791 = vrot.slane %v786, %v790
        %v792 = vlaneseq
        %v793 = vshrl.u32 %v792, 7
        %v794 = vsub.s32 0, %v793
        %v795 = vrot.slane %v787, %v794
        %v798 = vcombine.low %v791, %v795
        %v800 = vmul.f32 %v307, %v798
        %v801 = vadd.f32 %v457, %v751
        %v802 = vadd.f32 %v476, %v757
        %v803 = vmax.f32 %v801, %v802
        %v804 = vsub.f32 %v801, %v803
        %v805 = vmul.f32 %v804, 1.442695
        %v806 = vpow.pop %v805
        %v807 = vsub.f32 %v802, %v803
        %v808 = vmul.f32 %v807, 1.442695
        %v809 = vpow.pop %v808
        %v810 = vadd.f32 %v806, %v809
        %v811 = vrcp.pop %v810
        %v812 = vmul.f32 %v806, %v811
        %v813 = vmul.f32 %v809, %v811
        %v815 = vlaneseq
        %v816 = vshrl.u32 %v815, 7
        %v817 = vsub.s32 0, %v816
        %v818 = vrot.slane %v812, %v817
        %v819 = vlaneseq
        %v820 = vshrl.u32 %v819, 7
        %v821 = vsub.s32 4, %v820
        %v822 = vrot.slane %v812, %v821
        %v825 = vlaneseq
        %v826 = vshrl.u32 %v825, 7
        %v827 = vsub.s32 0, %v826
        %v828 = vrot.slane %v818, %v827
        %v829 = vlaneseq
        %v830 = vshrl.u32 %v829, 7
        %v831 = vsub.s32 0, %v830
        %v832 = vrot.slane %v822, %v831
        %v833 = vmul.f32 %v828, %v386
        %v834 = vmul.f32 %v832, %v609
        %v836 = vlaneseq
        %v837 = vshrl.u32 %v836, 7
        %v838 = vsub.s32 0, %v837
        %v839 = vrot.slane %v813, %v838
        %v840 = vlaneseq
        %v841 = vshrl.u32 %v840, 7
        %v842 = vsub.s32 4, %v841
        %v843 = vrot.slane %v813, %v842
        %v846 = vlaneseq
        %v847 = vshrl.u32 %v846, 7
        %v848 = vsub.s32 0, %v847
        %v849 = vrot.slane %v839, %v848
        %v850 = vlaneseq
        %v851 = vshrl.u32 %v850, 7
        %v852 = vsub.s32 0, %v851
        %v853 = vrot.slane %v843, %v852
        %v855 = vcombine.high %v400, %v400
        %v857 = vmul.f32 %v849, %v400
        %v858 = vmul.f32 %v853, %v855
        %v859 = vadd.f32 %v833, %v857
        %v860 = vadd.f32 %v834, %v858
        %v862 = vcombine.high %v800, %v800
        %s864 = scalar_lea.vmem %s298, 32
        %865 = vst [vmem:[%s864] sm:$0xf] %v800
        %866 = vst [vmem:[%s864 + $0x8] sm:$0xf] %v862
        %v869 = vrot.slane %v859, 4
        %v870 = vrot.slane %v860, 4
        %873 = vst [vmem:[%s864] sm:$0xf0] %v869
        %874 = vst [vmem:[%s864 + $0x8] sm:$0xf0] %v870
        %s875 = sld [smem:[#allocation4]]
        %v876 = vstv %s875
        %v877 = vadd.f32 %v748, %v876
        %v878 = vadd.f32 %v749, %v876
        %s879 = sld [smem:[#allocation4 + $0x1]]
        %v880 = vstv %s879
        %v881 = vadd.f32 %v754, %v880
        %v882 = vadd.f32 %v755, %v880
        %v883 = vmax.f32 %v877, %v881
        %v884 = vmax.f32 %v878, %v882
        %v885 = vsub.f32 %v877, %v883
        %v886 = vsub.f32 %v878, %v884
        %v887 = vmul.f32 %v885, 1.442695
        %v888 = vpow.pop %v887
        %v889 = vmul.f32 %v886, 1.442695
        %v890 = vpow.pop %v889
        %v891 = vsub.f32 %v881, %v883
        %v892 = vsub.f32 %v882, %v884
        %v893 = vmul.f32 %v891, 1.442695
        %v894 = vpow.pop %v893
        %v895 = vmul.f32 %v892, 1.442695
        %v896 = vpow.pop %v895
        %v897 = vadd.f32 %v888, %v894
        %v898 = vadd.f32 %v890, %v896
        %v899 = vrcp.pop %v897
        %v900 = vrcp.pop %v898
        %v901 = vmul.f32 %v888, %v899
        %v902 = vmul.f32 %v890, %v900
        %v903 = vmul.f32 %v894, %v899
        %v904 = vmul.f32 %v896, %v900
        %v905 = vmul.f32 %v901, %v383
        %v906 = vmul.f32 %v902, %v384
        %v907 = vmul.f32 %v903, %v397
        %v908 = vmul.f32 %v904, %v398
        %v909 = vadd.f32 %v905, %v907
        %v910 = vadd.f32 %v906, %v908
        %v911 = vlaneseq
        %v912 = vshrl.u32 %v911, 7
        %v913 = vsub.s32 0, %v912
        %v914 = vrot.slane %v909, %v913
        %v915 = vlaneseq
        %v916 = vshrl.u32 %v915, 7
        %v917 = vsub.s32 0, %v916
        %v918 = vrot.slane %v910, %v917
        %v921 = vcombine.low %v914, %v918
        %v923 = vmul.f32 %v307, %v921
        %v924 = vadd.f32 %v457, %v876
        %v925 = vadd.f32 %v476, %v880
        %v926 = vmax.f32 %v924, %v925
        %v927 = vsub.f32 %v924, %v926
        %v928 = vmul.f32 %v927, 1.442695
        %v929 = vpow.pop %v928
        %v930 = vsub.f32 %v925, %v926
        %v931 = vmul.f32 %v930, 1.442695
        %v932 = vpow.pop %v931
        %v933 = vadd.f32 %v929, %v932
        %v934 = vrcp.pop %v933
        %v935 = vmul.f32 %v929, %v934
        %v936 = vmul.f32 %v932, %v934
        %v938 = vlaneseq
        %v939 = vshrl.u32 %v938, 7
        %v940 = vsub.s32 0, %v939
        %v941 = vrot.slane %v935, %v940
        %v942 = vlaneseq
        %v943 = vshrl.u32 %v942, 7
        %v944 = vsub.s32 4, %v943
        %v945 = vrot.slane %v935, %v944
        %v948 = vlaneseq
        %v949 = vshrl.u32 %v948, 7
        %v950 = vsub.s32 0, %v949
        %v951 = vrot.slane %v941, %v950
        %v952 = vlaneseq
        %v953 = vshrl.u32 %v952, 7
        %v954 = vsub.s32 0, %v953
        %v955 = vrot.slane %v945, %v954
        %v956 = vmul.f32 %v951, %v386
        %v957 = vmul.f32 %v955, %v609
        %v959 = vlaneseq
        %v960 = vshrl.u32 %v959, 7
        %v961 = vsub.s32 0, %v960
        %v962 = vrot.slane %v936, %v961
        %v963 = vlaneseq
        %v964 = vshrl.u32 %v963, 7
        %v965 = vsub.s32 4, %v964
        %v966 = vrot.slane %v936, %v965
        %v969 = vlaneseq
        %v970 = vshrl.u32 %v969, 7
        %v971 = vsub.s32 0, %v970
        %v972 = vrot.slane %v962, %v971
        %v973 = vlaneseq
        %v974 = vshrl.u32 %v973, 7
        %v975 = vsub.s32 0, %v974
        %v976 = vrot.slane %v966, %v975
        %v977 = vmul.f32 %v972, %v400
        %v978 = vmul.f32 %v976, %v855
        %v979 = vadd.f32 %v956, %v977
        %v980 = vadd.f32 %v957, %v978
        %v982 = vcombine.high %v923, %v923
        %s984 = scalar_lea.vmem %s298, 48
        %985 = vst [vmem:[%s984] sm:$0xf] %v923
        %986 = vst [vmem:[%s984 + $0x8] sm:$0xf] %v982
        %v989 = vrot.slane %v979, 4
        %v990 = vrot.slane %v980, 4
        %993 = vst [vmem:[%s984] sm:$0xf0] %v989
        %994 = vst [vmem:[%s984 + $0x8] sm:$0xf0] %v990
        %s995 = smul.u32 2, %s22
        %p996 = scmp.lt.s32.totalorder %s21, 1
        %s997 = scalar_select %p996, %s21, 1
        %p998 = scmp.lt.s32.totalorder %s995, 1
        %s999 = scalar_select %p998, %s995, 1
        %s1000 = smul.addr %s997, 8
        %s1001 = sadd.s32 %s999, %s1000
        %s1002 = smul.addr %s1001, 8
        %s1003 = scalar_lea.vmem %s4, %s1002
        // Predicated region
        $region45: #{run.1} parent=35 // pred_check
          %p1004 = pneg %p147
        $region46: #{run.1} parent=35 // pred_check_branch
          %1006 = sbr.rel (%p1004) target = $region48
        $region47: #{run.1} parent=35 // pred_region
          %s1007 = smul.u32 2, %s22
        $region48: #{run.1} parent=35 // pred_fallthru
          _
      $region36: #{run.1} parent=5 // pred_fallthru
        _
      %p1008 = scmp.le.s32.totalorder 2, %s12
      // Predicated region
      $region49: #{run.1} parent=5 // pred_check
        %p1009 = pneg %p1008
      $region50: #{run.1} parent=5 // pred_check_branch
        %1011 = sbr.rel (%p1009) target = $region52
      $region51: #{run.1} parent=5 // pred_region
        %s1012 = ssub.s32 %s12, 2
        // Predicated region
        $region53: #{run.1} parent=51 // pred_check
          %p1013 = pneg %p153
        $region54: #{run.1} parent=51 // pred_check_branch
          %1015 = sbr.rel (%p1013) target = $region56
        $region55: #{run.1} parent=51 // pred_region
          %s1016 = smul.u32 2, %s24
          %p1017 = scmp.lt.s32.totalorder %s23, 1
          %s1018 = scalar_select %p1017, %s23, 1
          %p1019 = scmp.lt.s32.totalorder %s1016, 1
          %s1020 = scalar_select %p1019, %s1016, 1
          %s1021 = smul.addr %s1018, 8
          %s1022 = sadd.s32 %s1020, %s1021
          %s1023 = smul.addr %s1022, 8
          %s1024 = scalar_lea.vmem %s4, %s1023
        $region56: #{run.1} parent=51 // pred_fallthru
          _
      $region52: #{run.1} parent=5 // pred_fallthru
        _
    $region6: #{run.1} parent=1 // loop_footer
      %s16 = sadd.s32 1, %s12
    $region7: #{run.1} parent=1 // loop_footer_branch
      %11 = sbr.rel target = $region3
    $region8: #{run.1} parent=1 // loop_exit
      _
    %1025 = vsyncpa [#allocation3], 1
    %s1026 = scalar_lea.sflag [#allocation3], 1
    %1027 = vsyncpa %s1026, 1
    %1028 = vsyncpa [#allocation5], 1

</llo_original>
